<compile_context>
chip_gen: v7x
topology: tpu7x:2x2x1
jax: 0.10.0
libtpu: 0.0.40
codegen_flags: <defaults>
</compile_context>

<pallas_src>
import math
import functools

import jax
import jax.numpy as jnp
from jax.experimental import pallas as pl
from jax.experimental.pallas import tpu as pltpu

NEG_BIG = -1e30  # large finite negative instead of -inf (avoids NaN on fully-masked rows)


# --------------------------------------------------------------------------
# Pallas kernels
# --------------------------------------------------------------------------

def _attn_block_kernel(x_ref, kv_ref, wqkv_ref, bqkv_ref, wo_ref, bo_ref,
                       kbias_ref, g_ref, b_ref, o_ref,
                       *, nhead, scale, eps, causal, self_attn):
    """One batch element: QKV proj -> MHA -> out proj -> +residual -> LayerNorm."""
    x = x_ref[0]                                  # (Sq, D) f32 (also the residual)
    Sq, D = x.shape
    Dh = D // nhead
    xb = x.astype(jnp.bfloat16)
    wqkv = wqkv_ref[...]                          # (D, 3D) bf16
    bqkv = bqkv_ref[...]                          # (1, 3D) f32

    if self_attn:
        # single fused [D, 3D] projection
        qkv = jnp.dot(xb, wqkv, preferred_element_type=jnp.float32) + bqkv
        q = qkv[:, :D]
        k = qkv[:, D:2 * D]
        v = qkv[:, 2 * D:]
        Sk = Sq
    else:
        mem = kv_ref[0]                           # (Sk, D) f32
        Sk = mem.shape[0]
        memb = mem.astype(jnp.bfloat16)
        q = jnp.dot(xb, wqkv[:, :D], preferred_element_type=jnp.float32) + bqkv[:, :D]
        kv = jnp.dot(memb, wqkv[:, D:], preferred_element_type=jnp.float32) + bqkv[:, D:]
        k = kv[:, :D]
        v = kv[:, D:]

    # additive attention bias: key padding row (+ causal mask built in-kernel)
    bias = kbias_ref[0]                           # (1, Sk) f32, 0 / NEG_BIG
    if causal:
        rows = jax.lax.broadcasted_iota(jnp.int32, (Sq, Sk), 0)
        cols = jax.lax.broadcasted_iota(jnp.int32, (Sq, Sk), 1)
        bias = bias + jnp.where(cols <= rows, 0.0, NEG_BIG).astype(jnp.float32)

    wo = wo_ref[...]                              # (D, D) bf16
    # TODO(synk): for large Dh, pack heads into a batched einsum to better fill the MXU;
    # at Dh = D/nhead this static per-head loop is correct and keeps all work in one kernel.
    acc = jnp.zeros((Sq, D), jnp.float32)
    for h in range(nhead):
        sl = slice(h * Dh, (h + 1) * Dh)
        qh = q[:, sl].astype(jnp.bfloat16)
        kht = k[:, sl].T.astype(jnp.bfloat16)     # (Dh, Sk)
        vh = v[:, sl].astype(jnp.bfloat16)
        s = jnp.dot(qh, kht, preferred_element_type=jnp.float32) * scale + bias
        m = jnp.max(s, axis=-1, keepdims=True)
        p = jnp.exp(s - m)
        p = p * pl.reciprocal(jnp.sum(p, axis=-1, keepdims=True), approx=True)
        oh = jnp.dot(p.astype(jnp.bfloat16), vh, preferred_element_type=jnp.float32)
        # concat-free output projection: sum_h (o_h @ wo[h*Dh:(h+1)*Dh, :])
        acc = acc + jnp.dot(oh.astype(jnp.bfloat16), wo[sl, :],
                            preferred_element_type=jnp.float32)

    y = x + acc + bo_ref[...]
    mu = jnp.mean(y, axis=-1, keepdims=True)
    var = jnp.mean(y * y, axis=-1, keepdims=True) - mu * mu     # one-pass variance
    yn = (y - mu) * jax.lax.rsqrt(var + eps)
    o_ref[0] = (yn * g_ref[...] + b_ref[...]).astype(o_ref.dtype)


def _ffn_block_kernel(x_ref, w1_ref, b1_ref, w2_ref, b2_ref, g_ref, b_ref, o_ref, *, eps):
    """Row tile: FFN (W1/ReLU/W2) + residual + LayerNorm."""
    x = x_ref[...]                                # (tm, D) f32 (also the residual)
    h = jnp.dot(x.astype(jnp.bfloat16), w1_ref[...],
                preferred_element_type=jnp.float32) + b1_ref[...]
    h = jnp.maximum(h, 0.0)                       # ReLU
    f = jnp.dot(h.astype(jnp.bfloat16), w2_ref[...],
                preferred_element_type=jnp.float32) + b2_ref[...]
    y = x + f
    mu = jnp.mean(y, axis=-1, keepdims=True)
    var = jnp.mean(y * y, axis=-1, keepdims=True) - mu * mu
    yn = (y - mu) * jax.lax.rsqrt(var + eps)
    o_ref[...] = (yn * g_ref[...] + b_ref[...]).astype(o_ref.dtype)


def _ln_kernel(x_ref, g_ref, b_ref, o_ref, *, eps):
    """Row tile: plain LayerNorm (no residual, no zeros tensor)."""
    x = x_ref[...]
    mu = jnp.mean(x, axis=-1, keepdims=True)
    var = jnp.mean(x * x, axis=-1, keepdims=True) - mu * mu
    y = (x - mu) * jax.lax.rsqrt(var + eps)
    o_ref[...] = (y * g_ref[...] + b_ref[...]).astype(o_ref.dtype)


def _ln_proj_kernel(x_ref, g_ref, b_ref, w_ref, bo_ref, o_ref, *, eps):
    """Row tile: LayerNorm + output projection to a lane-padded vocab."""
    x = x_ref[...]
    mu = jnp.mean(x, axis=-1, keepdims=True)
    var = jnp.mean(x * x, axis=-1, keepdims=True) - mu * mu
    xn = (x - mu) * jax.lax.rsqrt(var + eps)
    xn = xn * g_ref[...] + b_ref[...]
    o_ref[...] = (jnp.dot(xn.astype(jnp.bfloat16), w_ref[...],
                          preferred_element_type=jnp.float32)
                  + bo_ref[...]).astype(o_ref.dtype)


# --------------------------------------------------------------------------
# Wrappers (pallas_call setup)
# --------------------------------------------------------------------------

_ROW_TILE = 256  # rows per grid step for row-wise kernels (full M when M is smaller)


def _row_tile(M):
    return M if M <= _ROW_TILE else _ROW_TILE


def attn_block(x, kv, p, kbias, ln_g, ln_b, nhead, eps, *, causal, self_attn):
    B, Sq, D = x.shape
    Sk = kv.shape[1]
    Dh = D // nhead
    kern = functools.partial(_attn_block_kernel, nhead=nhead,
                             scale=1.0 / math.sqrt(Dh), eps=eps,
                             causal=causal, self_attn=self_attn)
    return pl.pallas_call(
        kern,
        out_shape=jax.ShapeDtypeStruct((B, Sq, D), jnp.float32),
        grid=(B,),
        in_specs=[
            pl.BlockSpec((1, Sq, D), lambda i: (i, 0, 0)),       # x (query + residual)
            pl.BlockSpec((1, Sk, D), lambda i: (i, 0, 0)),       # kv input (memory or x)
            pl.BlockSpec((D, 3 * D), lambda i: (0, 0)),          # wqkv (bf16)
            pl.BlockSpec((1, 3 * D), lambda i: (0, 0)),          # bqkv
            pl.BlockSpec((D, D), lambda i: (0, 0)),              # wo (bf16)
            pl.BlockSpec((1, D), lambda i: (0, 0)),              # bo
            pl.BlockSpec((1, 1, Sk), lambda i: (i, 0, 0)),       # per-batch key-pad bias
            pl.BlockSpec((1, D), lambda i: (0, 0)),              # ln gamma
            pl.BlockSpec((1, D), lambda i: (0, 0)),              # ln beta
        ],
        out_specs=pl.BlockSpec((1, Sq, D), lambda i: (i, 0, 0)),
        compiler_params=pltpu.CompilerParams(dimension_semantics=("parallel",)),
    )(x, kv, p["wqkv"], p["bqkv"], p["wo"], p["bo"], kbias, ln_g, ln_b)


def ffn_block(x, p, ln_g, ln_b, eps):
    B, S, D = x.shape
    Dff = p["w1"].shape[1]
    x2 = x.reshape(-1, D)
    M = x2.shape[0]
    tm = _row_tile(M)
    kern = functools.partial(_ffn_block_kernel, eps=eps)
    # TODO(synk): for large D/Dff configs, tile the K/N weight dims with a VMEM accumulator
    # and set vmem_limit_bytes (v7x has only 64 MiB VMEM); monolithic weight blocks are fine
    # at this model size.
    out = pl.pallas_call(
        kern,
        out_shape=jax.ShapeDtypeStruct((M, D), jnp.float32),
        grid=(pl.cdiv(M, tm),),
        in_specs=[pl.BlockSpec((tm, D), lambda i: (i, 0)),
                  pl.BlockSpec((D, Dff), lambda i: (0, 0)),
                  pl.BlockSpec((1, Dff), lambda i: (0, 0)),
                  pl.BlockSpec((Dff, D), lambda i: (0, 0)),
                  pl.BlockSpec((1, D), lambda i: (0, 0)),
                  pl.BlockSpec((1, D), lambda i: (0, 0)),
                  pl.BlockSpec((1, D), lambda i: (0, 0))],
        out_specs=pl.BlockSpec((tm, D), lambda i: (i, 0)),
        compiler_params=pltpu.CompilerParams(dimension_semantics=("parallel",)),
    )(x2, p["w1"], p["b1"], p["w2"], p["b2"], ln_g, ln_b)
    return out.reshape(B, S, D)


def layernorm(x, g, b, eps):
    B, S, D = x.shape
    x2 = x.reshape(-1, D)
    M = x2.shape[0]
    tm = _row_tile(M)
    kern = functools.partial(_ln_kernel, eps=eps)
    out = pl.pallas_call(
        kern,
        out_shape=jax.ShapeDtypeStruct((M, D), jnp.float32),
        grid=(pl.cdiv(M, tm),),
        in_specs=[pl.BlockSpec((tm, D), lambda i: (i, 0)),
                  pl.BlockSpec((1, D), lambda i: (0, 0)),
                  pl.BlockSpec((1, D), lambda i: (0, 0))],
        out_specs=pl.BlockSpec((tm, D), lambda i: (i, 0)),
        compiler_params=pltpu.CompilerParams(dimension_semantics=("parallel",)),
    )(x2, g, b)
    return out.reshape(B, S, D)


def ln_out_proj(x, g, b, w_pad, b_pad, eps):
    B, S, D = x.shape
    Vp = w_pad.shape[1]
    x2 = x.reshape(-1, D)
    M = x2.shape[0]
    tm = _row_tile(M)
    kern = functools.partial(_ln_proj_kernel, eps=eps)
    out = pl.pallas_call(
        kern,
        out_shape=jax.ShapeDtypeStruct((M, Vp), jnp.float32),
        grid=(pl.cdiv(M, tm),),
        in_specs=[pl.BlockSpec((tm, D), lambda i: (i, 0)),
                  pl.BlockSpec((1, D), lambda i: (0, 0)),
                  pl.BlockSpec((1, D), lambda i: (0, 0)),
                  pl.BlockSpec((D, Vp), lambda i: (0, 0)),
                  pl.BlockSpec((1, Vp), lambda i: (0, 0))],
        out_specs=pl.BlockSpec((tm, Vp), lambda i: (i, 0)),
        compiler_params=pltpu.CompilerParams(dimension_semantics=("parallel",)),
    )(x2, g, b, w_pad, b_pad)
    return out.reshape(B, S, Vp)


# --------------------------------------------------------------------------
# Parameters (deterministic synthetic init) and full forward
# --------------------------------------------------------------------------

def make_positional_encoding(max_len, d_model):
    position = jnp.arange(max_len, dtype=jnp.float32)[:, None]
    div_term = jnp.exp(jnp.arange(0, d_model, 2, dtype=jnp.float32)
                       * (-math.log(10000.0) / d_model))
    pe = jnp.zeros((max_len, d_model), jnp.float32)
    pe = pe.at[:, 0::2].set(jnp.sin(position * div_term))
    pe = pe.at[:, 1::2].set(jnp.cos(position * div_term))
    return pe


def _attn_params(key, d):
    ks = jax.random.split(key, 4)
    wq = jax.random.normal(ks[0], (d, d), jnp.float32) / math.sqrt(d)
    wk = jax.random.normal(ks[1], (d, d), jnp.float32) / math.sqrt(d)
    wv = jax.random.normal(ks[2], (d, d), jnp.float32) / math.sqrt(d)
    wo = jax.random.normal(ks[3], (d, d), jnp.float32) / math.sqrt(d)
    return dict(
        wqkv=jnp.concatenate([wq, wk, wv], axis=1).astype(jnp.bfloat16),
        bqkv=jnp.zeros((1, 3 * d), jnp.float32),
        wo=wo.astype(jnp.bfloat16),
        bo=jnp.zeros((1, d), jnp.float32),
    )


def _ffn_params(key, d, dff):
    k1, k2 = jax.random.split(key)
    w1 = jax.random.normal(k1, (d, dff), jnp.float32) / math.sqrt(d)
    w2 = jax.random.normal(k2, (dff, d), jnp.float32) / math.sqrt(dff)
    return dict(w1=w1.astype(jnp.bfloat16), b1=jnp.zeros((1, dff), jnp.float32),
                w2=w2.astype(jnp.bfloat16), b2=jnp.zeros((1, d), jnp.float32))


def init_params(key, cfg, max_len=30000):
    d = cfg["d_model"]
    dff = cfg["dim_feedforward"]
    num_enc, num_dec = cfg["num_encoder_layers"], cfg["num_decoder_layers"]
    keys = jax.random.split(key, 3 + num_enc + num_dec)

    p = {}
    p["src_embed"] = jax.random.normal(keys[0], (cfg["source_size"], d), jnp.float32)
    p["tgt_embed"] = jax.random.normal(keys[1], (cfg["target_size"], d), jnp.float32)
    p["pe"] = make_positional_encoding(max_len, d)

    ones_d, zeros_d = jnp.ones((1, d), jnp.float32), jnp.zeros((1, d), jnp.float32)

    enc_layers = []
    for li in range(num_enc):
        ka, kf = jax.random.split(keys[2 + li])
        enc_layers.append(dict(
            attn=_attn_params(ka, d), ffn=_ffn_params(kf, d, dff),
            ln1_g=ones_d, ln1_b=zeros_d, ln2_g=ones_d, ln2_b=zeros_d))
    p["enc_layers"] = enc_layers

    dec_layers = []
    for li in range(num_dec):
        ka, kc, kf = jax.random.split(keys[2 + num_enc + li], 3)
        dec_layers.append(dict(
            self_attn=_attn_params(ka, d), cross_attn=_attn_params(kc, d),
            ffn=_ffn_params(kf, d, dff),
            ln1_g=ones_d, ln1_b=zeros_d, ln2_g=ones_d, ln2_b=zeros_d,
            ln3_g=ones_d, ln3_b=zeros_d))
    p["dec_layers"] = dec_layers

    p["enc_norm_g"], p["enc_norm_b"] = ones_d, zeros_d
    p["dec_norm_g"], p["dec_norm_b"] = ones_d, zeros_d

    # output projection, lane-padded vocab (multiple of 128), sliced back in the wrapper
    V = cfg["target_size"]
    Vp = ((V + 127) // 128) * 128
    w_out = jax.random.normal(keys[2 + num_enc + num_dec], (d, V), jnp.float32) / math.sqrt(d)
    p["w_out_pad"] = jnp.zeros((d, Vp), jnp.float32).at[:, :V].set(w_out).astype(jnp.bfloat16)
    p["b_out_pad"] = jnp.zeros((1, Vp), jnp.float32)
    return p


def transformer_forward(params, src_tokens, tgt_tokens, cfg):
    d_model, nhead, eps = cfg["d_model"], cfg["nhead"], cfg["layer_norm_eps"]
    B, Ss = src_tokens.shape
    St = tgt_tokens.shape[1]
    pe = params["pe"]

    # src/tgt forward functions: embed * sqrt(d_model) + PE; pad masks from pad tokens.
    # TODO(synk): dropout (p=0.1) is identity here (deterministic / eval semantics).
    src_emb = (jnp.take(params["src_embed"], src_tokens, axis=0) * math.sqrt(d_model)
               + pe[None, :Ss, :]).astype(jnp.float32)
    tgt_emb = (jnp.take(params["tgt_embed"], tgt_tokens, axis=0) * math.sqrt(d_model)
               + pe[None, :St, :]).astype(jnp.float32)

    # per-batch additive key-padding bias rows (built in the kernel into full masks)
    src_kbias = jnp.where(src_tokens == cfg["src_pad_token"], NEG_BIG, 0.0) \
                   .astype(jnp.float32).reshape(B, 1, Ss)
    tgt_kbias = jnp.where(tgt_tokens == cfg["tgt_pad_token"], NEG_BIG, 0.0) \
                   .astype(jnp.float32).reshape(B, 1, St)

    # --- encoder stack (+ final encoder LayerNorm) ---
    x = src_emb
    for lp in params["enc_layers"]:
        x = attn_block(x, x, lp["attn"], src_kbias, lp["ln1_g"], lp["ln1_b"],
                       nhead, eps, causal=False, self_attn=True)
        x = ffn_block(x, lp["ffn"], lp["ln2_g"], lp["ln2_b"], eps)
    memory = layernorm(x, params["enc_norm_g"], params["enc_norm_b"], eps)

    # --- decoder stack ---
    y = tgt_emb
    for lp in params["dec_layers"]:
        y = attn_block(y, y, lp["self_attn"], tgt_kbias, lp["ln1_g"], lp["ln1_b"],
                       nhead, eps, causal=True, self_attn=True)
        y = attn_block(y, memory, lp["cross_attn"], src_kbias, lp["ln2_g"], lp["ln2_b"],
                       nhead, eps, causal=False, self_attn=False)
        y = ffn_block(y, lp["ffn"], lp["ln3_g"], lp["ln3_b"], eps)

    # --- final decoder LayerNorm fused with output projection (padded vocab) ---
    logits = ln_out_proj(y, params["dec_norm_g"], params["dec_norm_b"],
                         params["w_out_pad"], params["b_out_pad"], eps)
    return logits[:, :, :cfg["target_size"]]


# --------------------------------------------------------------------------

if __name__ == "__main__":
    cfg = dict(d_model=32, nhead=4, num_encoder_layers=2, num_decoder_layers=2,
               dim_feedforward=64, source_size=50, target_size=30,
               src_pad_token=0, tgt_pad_token=0, layer_norm_eps=1e-5)

    key = jax.random.PRNGKey(0)
    kp, ks, kt = jax.random.split(key, 3)
    params = init_params(kp, cfg)

    B, Ss, St = 2, 10, 8
    src = jax.random.randint(ks, (B, Ss), 1, cfg["source_size"], dtype=jnp.int32)
    tgt = jax.random.randint(kt, (B, St), 1, cfg["target_size"], dtype=jnp.int32)
    # put some padding at the tail of the second sequence
    src = src.at[1, 8:].set(cfg["src_pad_token"])
    tgt = tgt.at[1, 6:].set(cfg["tgt_pad_token"])

    out = transformer_forward(params, src, tgt, cfg)
    out = jax.block_until_ready(out)

    assert out.shape == (B, St, cfg["target_size"]), out.shape
    assert bool(jnp.all(jnp.isfinite(out)))
    print("KERNEL_OK")
</pallas_src>

<mosaic_0001>
module attributes {stable_mosaic.version = 11 : i64} {
  func.func @_attn_block_kernel(%arg0: i32, %arg1: memref<1x10x32xf32, #tpu.memory_space<vmem>>, %arg2: memref<1x10x32xf32, #tpu.memory_space<vmem>>, %arg3: memref<32x96xbf16, #tpu.memory_space<vmem>>, %arg4: memref<1x96xf32, #tpu.memory_space<vmem>>, %arg5: memref<32x32xbf16, #tpu.memory_space<vmem>>, %arg6: memref<1x32xf32, #tpu.memory_space<vmem>>, %arg7: memref<1x1x10xf32, #tpu.memory_space<vmem>>, %arg8: memref<1x32xf32, #tpu.memory_space<vmem>>, %arg9: memref<1x32xf32, #tpu.memory_space<vmem>>, %arg10: memref<1x10x32xf32, #tpu.memory_space<vmem>>) attributes {dimension_semantics = [#tpu.dimension_semantics<parallel>], iteration_bounds = array<i64: 2>, scalar_prefetch = 0 : i64, scratch_operands = 0 : i64, tpu.core_type = #tpu.core_type<tc>, window_params = [{transform_indices = @transform_0, window_bounds = array<i64: 1, 10, 32>}, {transform_indices = @transform_1, window_bounds = array<i64: 1, 10, 32>}, {pipeline_mode = #tpu.pipeline_mode<synchronous>, transform_indices = @transform_2, window_bounds = array<i64: 32, 96>}, {pipeline_mode = #tpu.pipeline_mode<synchronous>, transform_indices = @transform_3, window_bounds = array<i64: 1, 96>}, {pipeline_mode = #tpu.pipeline_mode<synchronous>, transform_indices = @transform_4, window_bounds = array<i64: 32, 32>}, {pipeline_mode = #tpu.pipeline_mode<synchronous>, transform_indices = @transform_5, window_bounds = array<i64: 1, 32>}, {transform_indices = @transform_6, window_bounds = array<i64: 1, 1, 10>}, {pipeline_mode = #tpu.pipeline_mode<synchronous>, transform_indices = @transform_7, window_bounds = array<i64: 1, 32>}, {pipeline_mode = #tpu.pipeline_mode<synchronous>, transform_indices = @transform_8, window_bounds = array<i64: 1, 32>}, {transform_indices = @transform_9, window_bounds = array<i64: 1, 10, 32>}]} {
    %c0 = arith.constant 0 : index
    %c0_0 = arith.constant 0 : index
    %c0_1 = arith.constant 0 : index
    %0 = vector.load %arg1[%c0, %c0_0, %c0_1] : memref<1x10x32xf32, #tpu.memory_space<vmem>>, vector<1x10x32xf32>
    %1 = vector.shape_cast %0 : vector<1x10x32xf32> to vector<10x32xf32>
    %2 = arith.truncf %1 : vector<10x32xf32> to vector<10x32xbf16>
    %c0_2 = arith.constant 0 : index
    %c0_3 = arith.constant 0 : index
    %3 = vector.load %arg3[%c0_2, %c0_3] : memref<32x96xbf16, #tpu.memory_space<vmem>>, vector<32x96xbf16>
    %c0_4 = arith.constant 0 : index
    %c0_5 = arith.constant 0 : index
    %4 = vector.load %arg4[%c0_4, %c0_5] : memref<1x96xf32, #tpu.memory_space<vmem>>, vector<1x96xf32>
    %cst = arith.constant dense<0.000000e+00> : vector<10x96xf32>
    %5 = tpu.matmul %2, %3, %cst {dimension_numbers = #tpu.dot_dimension_numbers<[1], [0], [0], [1], [0, 0, 1, 1], [], []>} : vector<10x32xbf16>, vector<32x96xbf16>, vector<10x96xf32> -> vector<10x96xf32>
    %6 = vector.broadcast %4 : vector<1x96xf32> to vector<10x96xf32>
    %7 = arith.addf %5, %6 : vector<10x96xf32>
    %8 = vector.extract_strided_slice %7 {offsets = [0, 0], sizes = [10, 32], strides = [1, 1]} : vector<10x96xf32> to vector<10x32xf32>
    %9 = vector.extract_strided_slice %7 {offsets = [0, 32], sizes = [10, 32], strides = [1, 1]} : vector<10x96xf32> to vector<10x32xf32>
    %10 = vector.extract_strided_slice %7 {offsets = [0, 64], sizes = [10, 32], strides = [1, 1]} : vector<10x96xf32> to vector<10x32xf32>
    %c0_6 = arith.constant 0 : index
    %c0_7 = arith.constant 0 : index
    %c0_8 = arith.constant 0 : index
    %11 = vector.load %arg7[%c0_6, %c0_7, %c0_8] : memref<1x1x10xf32, #tpu.memory_space<vmem>>, vector<1x1x10xf32>
    %12 = vector.shape_cast %11 : vector<1x1x10xf32> to vector<1x10xf32>
    %c0_9 = arith.constant 0 : index
    %c0_10 = arith.constant 0 : index
    %13 = vector.load %arg5[%c0_9, %c0_10] : memref<32x32xbf16, #tpu.memory_space<vmem>>, vector<32x32xbf16>
    %cst_11 = arith.constant 0.000000e+00 : f32
    %14 = vector.broadcast %cst_11 : f32 to vector<10x32xf32>
    %15 = vector.extract_strided_slice %8 {offsets = [0, 0], sizes = [10, 8], strides = [1, 1]} : vector<10x32xf32> to vector<10x8xf32>
    %16 = arith.truncf %15 : vector<10x8xf32> to vector<10x8xbf16>
    %17 = vector.extract_strided_slice %9 {offsets = [0, 0], sizes = [10, 8], strides = [1, 1]} : vector<10x32xf32> to vector<10x8xf32>
    %18 = tpu.transpose %17, [1, 0] : vector<10x8xf32> -> vector<8x10xf32>
    %19 = arith.truncf %18 : vector<8x10xf32> to vector<8x10xbf16>
    %20 = vector.extract_strided_slice %10 {offsets = [0, 0], sizes = [10, 8], strides = [1, 1]} : vector<10x32xf32> to vector<10x8xf32>
    %21 = arith.truncf %20 : vector<10x8xf32> to vector<10x8xbf16>
    %cst_12 = arith.constant dense<0.000000e+00> : vector<10x10xf32>
    %22 = tpu.matmul %16, %19, %cst_12 {dimension_numbers = #tpu.dot_dimension_numbers<[1], [0], [0], [1], [0, 0, 1, 1], [], []>} : vector<10x8xbf16>, vector<8x10xbf16>, vector<10x10xf32> -> vector<10x10xf32>
    %cst_13 = arith.constant 0.353553385 : f32
    %23 = vector.broadcast %cst_13 : f32 to vector<10x10xf32>
    %24 = arith.mulf %22, %23 : vector<10x10xf32>
    %25 = vector.broadcast %12 : vector<1x10xf32> to vector<10x10xf32>
    %26 = arith.addf %24, %25 : vector<10x10xf32>
    %cst_14 = arith.constant dense<0xFF800000> : vector<10xf32>
    %27 = vector.multi_reduction <maximumf>, %26, %cst_14 [1] : vector<10x10xf32> to vector<10xf32>
    %28 = vector.shape_cast %27 : vector<10xf32> to vector<10x1xf32>
    %29 = vector.broadcast %28 : vector<10x1xf32> to vector<10x10xf32>
    %30 = arith.subf %26, %29 : vector<10x10xf32>
    %31 = math.exp %30 : vector<10x10xf32>
    %cst_15 = arith.constant dense<0.000000e+00> : vector<10xf32>
    %32 = vector.multi_reduction <add>, %31, %cst_15 [1] : vector<10x10xf32> to vector<10xf32>
    %33 = vector.shape_cast %32 : vector<10xf32> to vector<10x1xf32>
    %34 = tpu.reciprocal %33 {approx = true} : vector<10x1xf32> -> vector<10x1xf32>
    %35 = vector.broadcast %34 : vector<10x1xf32> to vector<10x10xf32>
    %36 = arith.mulf %31, %35 : vector<10x10xf32>
    %37 = arith.truncf %36 : vector<10x10xf32> to vector<10x10xbf16>
    %cst_16 = arith.constant dense<0.000000e+00> : vector<10x8xf32>
    %38 = tpu.matmul %37, %21, %cst_16 {dimension_numbers = #tpu.dot_dimension_numbers<[1], [0], [0], [1], [0, 0, 1, 1], [], []>} : vector<10x10xbf16>, vector<10x8xbf16>, vector<10x8xf32> -> vector<10x8xf32>
    %39 = arith.truncf %38 : vector<10x8xf32> to vector<10x8xbf16>
    %40 = vector.extract_strided_slice %13 {offsets = [0, 0], sizes = [8, 32], strides = [1, 1]} : vector<32x32xbf16> to vector<8x32xbf16>
    %cst_17 = arith.constant dense<0.000000e+00> : vector<10x32xf32>
    %41 = tpu.matmul %39, %40, %cst_17 {dimension_numbers = #tpu.dot_dimension_numbers<[1], [0], [0], [1], [0, 0, 1, 1], [], []>} : vector<10x8xbf16>, vector<8x32xbf16>, vector<10x32xf32> -> vector<10x32xf32>
    %42 = arith.addf %14, %41 : vector<10x32xf32>
    %43 = vector.extract_strided_slice %8 {offsets = [0, 8], sizes = [10, 8], strides = [1, 1]} : vector<10x32xf32> to vector<10x8xf32>
    %44 = arith.truncf %43 : vector<10x8xf32> to vector<10x8xbf16>
    %45 = vector.extract_strided_slice %9 {offsets = [0, 8], sizes = [10, 8], strides = [1, 1]} : vector<10x32xf32> to vector<10x8xf32>
    %46 = tpu.transpose %45, [1, 0] : vector<10x8xf32> -> vector<8x10xf32>
    %47 = arith.truncf %46 : vector<8x10xf32> to vector<8x10xbf16>
    %48 = vector.extract_strided_slice %10 {offsets = [0, 8], sizes = [10, 8], strides = [1, 1]} : vector<10x32xf32> to vector<10x8xf32>
    %49 = arith.truncf %48 : vector<10x8xf32> to vector<10x8xbf16>
    %cst_18 = arith.constant dense<0.000000e+00> : vector<10x10xf32>
    %50 = tpu.matmul %44, %47, %cst_18 {dimension_numbers = #tpu.dot_dimension_numbers<[1], [0], [0], [1], [0, 0, 1, 1], [], []>} : vector<10x8xbf16>, vector<8x10xbf16>, vector<10x10xf32> -> vector<10x10xf32>
    %cst_19 = arith.constant 0.353553385 : f32
    %51 = vector.broadcast %cst_19 : f32 to vector<10x10xf32>
    %52 = arith.mulf %50, %51 : vector<10x10xf32>
    %53 = vector.broadcast %12 : vector<1x10xf32> to vector<10x10xf32>
    %54 = arith.addf %52, %53 : vector<10x10xf32>
    %cst_20 = arith.constant dense<0xFF800000> : vector<10xf32>
    %55 = vector.multi_reduction <maximumf>, %54, %cst_20 [1] : vector<10x10xf32> to vector<10xf32>
    %56 = vector.shape_cast %55 : vector<10xf32> to vector<10x1xf32>
    %57 = vector.broadcast %56 : vector<10x1xf32> to vector<10x10xf32>
    %58 = arith.subf %54, %57 : vector<10x10xf32>
    %59 = math.exp %58 : vector<10x10xf32>
    %cst_21 = arith.constant dense<0.000000e+00> : vector<10xf32>
    %60 = vector.multi_reduction <add>, %59, %cst_21 [1] : vector<10x10xf32> to vector<10xf32>
    %61 = vector.shape_cast %60 : vector<10xf32> to vector<10x1xf32>
    %62 = tpu.reciprocal %61 {approx = true} : vector<10x1xf32> -> vector<10x1xf32>
    %63 = vector.broadcast %62 : vector<10x1xf32> to vector<10x10xf32>
    %64 = arith.mulf %59, %63 : vector<10x10xf32>
    %65 = arith.truncf %64 : vector<10x10xf32> to vector<10x10xbf16>
    %cst_22 = arith.constant dense<0.000000e+00> : vector<10x8xf32>
    %66 = tpu.matmul %65, %49, %cst_22 {dimension_numbers = #tpu.dot_dimension_numbers<[1], [0], [0], [1], [0, 0, 1, 1], [], []>} : vector<10x10xbf16>, vector<10x8xbf16>, vector<10x8xf32> -> vector<10x8xf32>
    %67 = arith.truncf %66 : vector<10x8xf32> to vector<10x8xbf16>
    %68 = vector.extract_strided_slice %13 {offsets = [8, 0], sizes = [8, 32], strides = [1, 1]} : vector<32x32xbf16> to vector<8x32xbf16>
    %cst_23 = arith.constant dense<0.000000e+00> : vector<10x32xf32>
    %69 = tpu.matmul %67, %68, %cst_23 {dimension_numbers = #tpu.dot_dimension_numbers<[1], [0], [0], [1], [0, 0, 1, 1], [], []>} : vector<10x8xbf16>, vector<8x32xbf16>, vector<10x32xf32> -> vector<10x32xf32>
    %70 = arith.addf %42, %69 : vector<10x32xf32>
    %71 = vector.extract_strided_slice %8 {offsets = [0, 16], sizes = [10, 8], strides = [1, 1]} : vector<10x32xf32> to vector<10x8xf32>
    %72 = arith.truncf %71 : vector<10x8xf32> to vector<10x8xbf16>
    %73 = vector.extract_strided_slice %9 {offsets = [0, 16], sizes = [10, 8], strides = [1, 1]} : vector<10x32xf32> to vector<10x8xf32>
    %74 = tpu.transpose %73, [1, 0] : vector<10x8xf32> -> vector<8x10xf32>
    %75 = arith.truncf %74 : vector<8x10xf32> to vector<8x10xbf16>
    %76 = vector.extract_strided_slice %10 {offsets = [0, 16], sizes = [10, 8], strides = [1, 1]} : vector<10x32xf32> to vector<10x8xf32>
    %77 = arith.truncf %76 : vector<10x8xf32> to vector<10x8xbf16>
    %cst_24 = arith.constant dense<0.000000e+00> : vector<10x10xf32>
    %78 = tpu.matmul %72, %75, %cst_24 {dimension_numbers = #tpu.dot_dimension_numbers<[1], [0], [0], [1], [0, 0, 1, 1], [], []>} : vector<10x8xbf16>, vector<8x10xbf16>, vector<10x10xf32> -> vector<10x10xf32>
    %cst_25 = arith.constant 0.353553385 : f32
    %79 = vector.broadcast %cst_25 : f32 to vector<10x10xf32>
    %80 = arith.mulf %78, %79 : vector<10x10xf32>
    %81 = vector.broadcast %12 : vector<1x10xf32> to vector<10x10xf32>
    %82 = arith.addf %80, %81 : vector<10x10xf32>
    %cst_26 = arith.constant dense<0xFF800000> : vector<10xf32>
    %83 = vector.multi_reduction <maximumf>, %82, %cst_26 [1] : vector<10x10xf32> to vector<10xf32>
    %84 = vector.shape_cast %83 : vector<10xf32> to vector<10x1xf32>
    %85 = vector.broadcast %84 : vector<10x1xf32> to vector<10x10xf32>
    %86 = arith.subf %82, %85 : vector<10x10xf32>
    %87 = math.exp %86 : vector<10x10xf32>
    %cst_27 = arith.constant dense<0.000000e+00> : vector<10xf32>
    %88 = vector.multi_reduction <add>, %87, %cst_27 [1] : vector<10x10xf32> to vector<10xf32>
    %89 = vector.shape_cast %88 : vector<10xf32> to vector<10x1xf32>
    %90 = tpu.reciprocal %89 {approx = true} : vector<10x1xf32> -> vector<10x1xf32>
    %91 = vector.broadcast %90 : vector<10x1xf32> to vector<10x10xf32>
    %92 = arith.mulf %87, %91 : vector<10x10xf32>
    %93 = arith.truncf %92 : vector<10x10xf32> to vector<10x10xbf16>
    %cst_28 = arith.constant dense<0.000000e+00> : vector<10x8xf32>
    %94 = tpu.matmul %93, %77, %cst_28 {dimension_numbers = #tpu.dot_dimension_numbers<[1], [0], [0], [1], [0, 0, 1, 1], [], []>} : vector<10x10xbf16>, vector<10x8xbf16>, vector<10x8xf32> -> vector<10x8xf32>
    %95 = arith.truncf %94 : vector<10x8xf32> to vector<10x8xbf16>
    %96 = vector.extract_strided_slice %13 {offsets = [16, 0], sizes = [8, 32], strides = [1, 1]} : vector<32x32xbf16> to vector<8x32xbf16>
    %cst_29 = arith.constant dense<0.000000e+00> : vector<10x32xf32>
    %97 = tpu.matmul %95, %96, %cst_29 {dimension_numbers = #tpu.dot_dimension_numbers<[1], [0], [0], [1], [0, 0, 1, 1], [], []>} : vector<10x8xbf16>, vector<8x32xbf16>, vector<10x32xf32> -> vector<10x32xf32>
    %98 = arith.addf %70, %97 : vector<10x32xf32>
    %99 = vector.extract_strided_slice %8 {offsets = [0, 24], sizes = [10, 8], strides = [1, 1]} : vector<10x32xf32> to vector<10x8xf32>
    %100 = arith.truncf %99 : vector<10x8xf32> to vector<10x8xbf16>
    %101 = vector.extract_strided_slice %9 {offsets = [0, 24], sizes = [10, 8], strides = [1, 1]} : vector<10x32xf32> to vector<10x8xf32>
    %102 = tpu.transpose %101, [1, 0] : vector<10x8xf32> -> vector<8x10xf32>
    %103 = arith.truncf %102 : vector<8x10xf32> to vector<8x10xbf16>
    %104 = vector.extract_strided_slice %10 {offsets = [0, 24], sizes = [10, 8], strides = [1, 1]} : vector<10x32xf32> to vector<10x8xf32>
    %105 = arith.truncf %104 : vector<10x8xf32> to vector<10x8xbf16>
    %cst_30 = arith.constant dense<0.000000e+00> : vector<10x10xf32>
    %106 = tpu.matmul %100, %103, %cst_30 {dimension_numbers = #tpu.dot_dimension_numbers<[1], [0], [0], [1], [0, 0, 1, 1], [], []>} : vector<10x8xbf16>, vector<8x10xbf16>, vector<10x10xf32> -> vector<10x10xf32>
    %cst_31 = arith.constant 0.353553385 : f32
    %107 = vector.broadcast %cst_31 : f32 to vector<10x10xf32>
    %108 = arith.mulf %106, %107 : vector<10x10xf32>
    %109 = vector.broadcast %12 : vector<1x10xf32> to vector<10x10xf32>
    %110 = arith.addf %108, %109 : vector<10x10xf32>
    %cst_32 = arith.constant dense<0xFF800000> : vector<10xf32>
    %111 = vector.multi_reduction <maximumf>, %110, %cst_32 [1] : vector<10x10xf32> to vector<10xf32>
    %112 = vector.shape_cast %111 : vector<10xf32> to vector<10x1xf32>
    %113 = vector.broadcast %112 : vector<10x1xf32> to vector<10x10xf32>
    %114 = arith.subf %110, %113 : vector<10x10xf32>
    %115 = math.exp %114 : vector<10x10xf32>
    %cst_33 = arith.constant dense<0.000000e+00> : vector<10xf32>
    %116 = vector.multi_reduction <add>, %115, %cst_33 [1] : vector<10x10xf32> to vector<10xf32>
    %117 = vector.shape_cast %116 : vector<10xf32> to vector<10x1xf32>
    %118 = tpu.reciprocal %117 {approx = true} : vector<10x1xf32> -> vector<10x1xf32>
    %119 = vector.broadcast %118 : vector<10x1xf32> to vector<10x10xf32>
    %120 = arith.mulf %115, %119 : vector<10x10xf32>
    %121 = arith.truncf %120 : vector<10x10xf32> to vector<10x10xbf16>
    %cst_34 = arith.constant dense<0.000000e+00> : vector<10x8xf32>
    %122 = tpu.matmul %121, %105, %cst_34 {dimension_numbers = #tpu.dot_dimension_numbers<[1], [0], [0], [1], [0, 0, 1, 1], [], []>} : vector<10x10xbf16>, vector<10x8xbf16>, vector<10x8xf32> -> vector<10x8xf32>
    %123 = arith.truncf %122 : vector<10x8xf32> to vector<10x8xbf16>
    %124 = vector.extract_strided_slice %13 {offsets = [24, 0], sizes = [8, 32], strides = [1, 1]} : vector<32x32xbf16> to vector<8x32xbf16>
    %cst_35 = arith.constant dense<0.000000e+00> : vector<10x32xf32>
    %125 = tpu.matmul %123, %124, %cst_35 {dimension_numbers = #tpu.dot_dimension_numbers<[1], [0], [0], [1], [0, 0, 1, 1], [], []>} : vector<10x8xbf16>, vector<8x32xbf16>, vector<10x32xf32> -> vector<10x32xf32>
    %126 = arith.addf %98, %125 : vector<10x32xf32>
    %127 = arith.addf %1, %126 : vector<10x32xf32>
    %c0_36 = arith.constant 0 : index
    %c0_37 = arith.constant 0 : index
    %128 = vector.load %arg6[%c0_36, %c0_37] : memref<1x32xf32, #tpu.memory_space<vmem>>, vector<1x32xf32>
    %129 = vector.broadcast %128 : vector<1x32xf32> to vector<10x32xf32>
    %130 = arith.addf %127, %129 : vector<10x32xf32>
    %cst_38 = arith.constant dense<0.000000e+00> : vector<10xf32>
    %131 = vector.multi_reduction <add>, %130, %cst_38 [1] : vector<10x32xf32> to vector<10xf32>
    %132 = vector.shape_cast %131 : vector<10xf32> to vector<10x1xf32>
    %cst_39 = arith.constant 3.200000e+01 : f32
    %133 = vector.broadcast %cst_39 : f32 to vector<10x1xf32>
    %134 = arith.divf %132, %133 : vector<10x1xf32>
    %135 = arith.mulf %130, %130 : vector<10x32xf32>
    %cst_40 = arith.constant dense<0.000000e+00> : vector<10xf32>
    %136 = vector.multi_reduction <add>, %135, %cst_40 [1] : vector<10x32xf32> to vector<10xf32>
    %137 = vector.shape_cast %136 : vector<10xf32> to vector<10x1xf32>
    %cst_41 = arith.constant 3.200000e+01 : f32
    %138 = vector.broadcast %cst_41 : f32 to vector<10x1xf32>
    %139 = arith.divf %137, %138 : vector<10x1xf32>
    %140 = arith.mulf %134, %134 : vector<10x1xf32>
    %141 = arith.subf %139, %140 : vector<10x1xf32>
    %142 = vector.broadcast %134 : vector<10x1xf32> to vector<10x32xf32>
    %143 = arith.subf %130, %142 : vector<10x32xf32>
    %cst_42 = arith.constant 9.99999974E-6 : f32
    %144 = vector.broadcast %cst_42 : f32 to vector<10x1xf32>
    %145 = arith.addf %141, %144 : vector<10x1xf32>
    %146 = math.rsqrt %145 : vector<10x1xf32>
    %147 = vector.broadcast %146 : vector<10x1xf32> to vector<10x32xf32>
    %148 = arith.mulf %143, %147 : vector<10x32xf32>
    %c0_43 = arith.constant 0 : index
    %c0_44 = arith.constant 0 : index
    %149 = vector.load %arg8[%c0_43, %c0_44] : memref<1x32xf32, #tpu.memory_space<vmem>>, vector<1x32xf32>
    %150 = vector.broadcast %149 : vector<1x32xf32> to vector<10x32xf32>
    %151 = arith.mulf %148, %150 : vector<10x32xf32>
    %c0_45 = arith.constant 0 : index
    %c0_46 = arith.constant 0 : index
    %152 = vector.load %arg9[%c0_45, %c0_46] : memref<1x32xf32, #tpu.memory_space<vmem>>, vector<1x32xf32>
    %153 = vector.broadcast %152 : vector<1x32xf32> to vector<10x32xf32>
    %154 = arith.addf %151, %153 : vector<10x32xf32>
    %c0_47 = arith.constant 0 : index
    %c0_48 = arith.constant 0 : index
    %c0_49 = arith.constant 0 : index
    %155 = vector.load %arg10[%c0_47, %c0_48, %c0_49] : memref<1x10x32xf32, #tpu.memory_space<vmem>>, vector<1x10x32xf32>
    %156 = vector.shape_cast %155 : vector<1x10x32xf32> to vector<10x32xf32>
    %157 = vector.shape_cast %154 : vector<10x32xf32> to vector<1x10x32xf32>
    tpu.vector_store %arg10[%c0_47, %c0_48, %c0_49], %157 {strides = array<i32>} : memref<1x10x32xf32, #tpu.memory_space<vmem>>, vector<1x10x32xf32>,
    return
  }
  func.func @transform_0(%arg0: i32) -> (i32, i32, i32) {
    %c0_i32 = arith.constant 0 : i32
    %c0_i32_0 = arith.constant 0 : i32
    %c0_i32_1 = arith.constant 0 : i32
    return %arg0, %c0_i32, %c0_i32_0 : i32, i32, i32
  }
  func.func @transform_1(%arg0: i32) -> (i32, i32, i32) {
    %c0_i32 = arith.constant 0 : i32
    %c0_i32_0 = arith.constant 0 : i32
    %c0_i32_1 = arith.constant 0 : i32
    return %arg0, %c0_i32, %c0_i32_0 : i32, i32, i32
  }
  func.func @transform_2(%arg0: i32) -> (i32, i32) {
    %c0_i32 = arith.constant 0 : i32
    %c0_i32_0 = arith.constant 0 : i32
    %c0_i32_1 = arith.constant 0 : i32
    return %c0_i32, %c0_i32_0 : i32, i32
  }
  func.func @transform_3(%arg0: i32) -> (i32, i32) {
    %c0_i32 = arith.constant 0 : i32
    %c0_i32_0 = arith.constant 0 : i32
    %c0_i32_1 = arith.constant 0 : i32
    return %c0_i32, %c0_i32_0 : i32, i32
  }
  func.func @transform_4(%arg0: i32) -> (i32, i32) {
    %c0_i32 = arith.constant 0 : i32
    %c0_i32_0 = arith.constant 0 : i32
    %c0_i32_1 = arith.constant 0 : i32
    return %c0_i32, %c0_i32_0 : i32, i32
  }
  func.func @transform_5(%arg0: i32) -> (i32, i32) {
    %c0_i32 = arith.constant 0 : i32
    %c0_i32_0 = arith.constant 0 : i32
    %c0_i32_1 = arith.constant 0 : i32
    return %c0_i32, %c0_i32_0 : i32, i32
  }
  func.func @transform_6(%arg0: i32) -> (i32, i32, i32) {
    %c0_i32 = arith.constant 0 : i32
    %c0_i32_0 = arith.constant 0 : i32
    %c0_i32_1 = arith.constant 0 : i32
    return %arg0, %c0_i32, %c0_i32_0 : i32, i32, i32
  }
  func.func @transform_7(%arg0: i32) -> (i32, i32) {
    %c0_i32 = arith.constant 0 : i32
    %c0_i32_0 = arith.constant 0 : i32
    %c0_i32_1 = arith.constant 0 : i32
    return %c0_i32, %c0_i32_0 : i32, i32
  }
  func.func @transform_8(%arg0: i32) -> (i32, i32) {
    %c0_i32 = arith.constant 0 : i32
    %c0_i32_0 = arith.constant 0 : i32
    %c0_i32_1 = arith.constant 0 : i32
    return %c0_i32, %c0_i32_0 : i32, i32
  }
  func.func @transform_9(%arg0: i32) -> (i32, i32, i32) {
    %c0_i32 = arith.constant 0 : i32
    %c0_i32_0 = arith.constant 0 : i32
    %c0_i32_1 = arith.constant 0 : i32
    return %arg0, %c0_i32, %c0_i32_0 : i32, i32, i32
  }
}

</mosaic_0001>

<llo_original>
// kernel: tpu_custom_call.1
$region0: #{tpu_custom_call.1}
  #allocation0 [shape = 'u32[]', space=smem, size = 0x4, offset = 0x4, fixed_abs, tag = 'smem constant byte address 0x4 - core index']
  #allocation1 [shape = 'u32[144,128]{1,0:T(1,128)}', space=vmem, size = 0x12000, scoped, tag = 'internal scratch']
  %s0 = inlined_call_operand.vmem [shape: f32[2,10,32], index: 0, kind: input, shape index: {}]
  %s1 = inlined_call_operand.vmem [shape: f32[2,10,32], index: 1, kind: input, shape index: {}]
  %s2 = inlined_call_operand.vmem [shape: bf16[32,96], index: 2, kind: input, shape index: {}]
  %s3 = inlined_call_operand.vmem [shape: f32[1,96], index: 3, kind: input, shape index: {}]
  %s4 = inlined_call_operand.vmem [shape: bf16[32,32], index: 4, kind: input, shape index: {}]
  %s5 = inlined_call_operand.vmem [shape: f32[1,32], index: 5, kind: input, shape index: {}]
  %s6 = inlined_call_operand.vmem [shape: f32[2,1,10], index: 6, kind: input, shape index: {}]
  %s7 = inlined_call_operand.vmem [shape: f32[1,32], index: 7, kind: input, shape index: {}]
  %s8 = inlined_call_operand.vmem [shape: f32[1,32], index: 8, kind: input, shape index: {}]
  %s9 = inlined_call_operand.vmem [shape: f32[2,10,32], index: 9, kind: output, shape index: {}]
  %s10 = sld [smem:[#allocation0]]
  $region69: #{tpu_custom_call.1} parent=0
    _
  %s12 = ssub.s32 1, %s10
  %s13 = scalar_select 0, %s12, %s10
  loop: start=0, step=1, limit=4
  $region2: #{tpu_custom_call.1} parent=0 // loop_pre_header
    _
  $region3: #{tpu_custom_call.1} parent=0 // loop_header
    %s15 = sphi 0, %s19
    %p16 = scmp.ge.s32.totalorder %s15, 4
    %s25 = sphi 0, %s27
    %s28 = sphi 0, %s25
    %s29 = sphi 0, %s28
    %s45 = sphi 0, %s29
    %s51 = sphi 0, %s53
    %s54 = sphi 0, %s51
    %s55 = sphi 0, %s54
    %s71 = sphi 0, %s55
    %s75 = sphi 0, %s75
    %s77 = sphi 0, %s75
    %s78 = sphi 0, %s77
    %s92 = sphi 0, %s78
    %s96 = sphi 0, %s96
    %s98 = sphi 0, %s96
    %s99 = sphi 0, %s98
    %s113 = sphi 0, %s99
    %s117 = sphi 0, %s117
    %s119 = sphi 0, %s117
    %s120 = sphi 0, %s119
    %s134 = sphi 0, %s120
    %s138 = sphi 0, %s138
    %s140 = sphi 0, %s138
    %s141 = sphi 0, %s140
    %s155 = sphi 0, %s141
    %s161 = sphi 0, %s163
    %s164 = sphi 0, %s161
    %s165 = sphi 0, %s164
    %s181 = sphi 0, %s165
    %s185 = sphi 0, %s185
    %s187 = sphi 0, %s185
    %s188 = sphi 0, %s187
    %s202 = sphi 0, %s188
    %s206 = sphi 0, %s206
    %s208 = sphi 0, %s206
    %s209 = sphi 0, %s208
    %s223 = sphi 0, %s209
    %s229 = sphi 0, %s231
    %s232 = sphi 0, %s229
    %s233 = sphi 0, %s232
    %s249 = sphi 0, %s233
  $region4: #{tpu_custom_call.1} parent=0 // loop_header_branch
    %18 = sbr.rel (%p16) target = $region8
  $region5: #{tpu_custom_call.1} parent=0 // loop_body
    %s20 = ssub.s32 %s15, 1
    %s21 = ssub.s32 %s15, 2
    %s22 = sadd.s32 %s15, 1
    %s23 = ssub.s32 %s15, %s22
    %p24 = scmp.eq.s32.totalorder %s23, 0
    %s26 = sadd.s32 %s25, 1
    %s27 = scalar_select %p24, %s25, %s26
    %p30 = pneg %p24
    %p31 = scmp.eq.s32.totalorder %s15, 1
    %p32 = por %p30, %p31
    %p33 = scmp.ne.s32.totalorder %s25, %s28
    %p34 = scmp.eq.s32.totalorder %s15, 0
    %p35 = por %p33, %p34
    %p36 = scmp.ne.s32.totalorder %s25, %s28
    %p37 = scmp.eq.s32.totalorder %s20, 1
    %p38 = por %p36, %p37
    %p39 = scmp.ne.s32.totalorder %s28, %s29
    %p40 = scmp.eq.s32.totalorder %s20, 0
    %p41 = por %p39, %p40
    %p42 = scmp.ne.s32.totalorder %s28, %s29
    %p43 = scmp.eq.s32.totalorder %s21, 1
    %p44 = por %p42, %p43
    %p46 = scmp.ne.s32.totalorder %s29, %s45
    %p47 = scmp.eq.s32.totalorder %s21, 0
    %p48 = por %p46, %p47
    %s49 = ssub.s32 %s15, %s22
    %p50 = scmp.eq.s32.totalorder %s49, 0
    %s52 = sadd.s32 %s51, 1
    %s53 = scalar_select %p50, %s51, %s52
    %p56 = pneg %p50
    %p57 = scmp.eq.s32.totalorder %s15, 1
    %p58 = por %p56, %p57
    %p59 = scmp.ne.s32.totalorder %s51, %s54
    %p60 = scmp.eq.s32.totalorder %s15, 0
    %p61 = por %p59, %p60
    %p62 = scmp.ne.s32.totalorder %s51, %s54
    %p63 = scmp.eq.s32.totalorder %s20, 1
    %p64 = por %p62, %p63
    %p65 = scmp.ne.s32.totalorder %s54, %s55
    %p66 = scmp.eq.s32.totalorder %s20, 0
    %p67 = por %p65, %p66
    %p68 = scmp.ne.s32.totalorder %s54, %s55
    %p69 = scmp.eq.s32.totalorder %s21, 1
    %p70 = por %p68, %p69
    %p72 = scmp.ne.s32.totalorder %s55, %s71
    %p73 = scmp.eq.s32.totalorder %s21, 0
    %p74 = por %p72, %p73
    %s76 = sadd.s32 %s75, 1
    %p79 = scmp.eq.s32.totalorder %s15, 1
    %p80 = scmp.ne.s32.totalorder %s75, %s77
    %p81 = scmp.eq.s32.totalorder %s15, 0
    %p82 = por %p80, %p81
    %p83 = scmp.ne.s32.totalorder %s75, %s77
    %p84 = scmp.eq.s32.totalorder %s20, 1
    %p85 = por %p83, %p84
    %p86 = scmp.ne.s32.totalorder %s77, %s78
    %p87 = scmp.eq.s32.totalorder %s20, 0
    %p88 = por %p86, %p87
    %p89 = scmp.ne.s32.totalorder %s77, %s78
    %p90 = scmp.eq.s32.totalorder %s21, 1
    %p91 = por %p89, %p90
    %p93 = scmp.ne.s32.totalorder %s78, %s92
    %p94 = scmp.eq.s32.totalorder %s21, 0
    %p95 = por %p93, %p94
    %s97 = sadd.s32 %s96, 1
    %p100 = scmp.eq.s32.totalorder %s15, 1
    %p101 = scmp.ne.s32.totalorder %s96, %s98
    %p102 = scmp.eq.s32.totalorder %s15, 0
    %p103 = por %p101, %p102
    %p104 = scmp.ne.s32.totalorder %s96, %s98
    %p105 = scmp.eq.s32.totalorder %s20, 1
    %p106 = por %p104, %p105
    %p107 = scmp.ne.s32.totalorder %s98, %s99
    %p108 = scmp.eq.s32.totalorder %s20, 0
    %p109 = por %p107, %p108
    %p110 = scmp.ne.s32.totalorder %s98, %s99
    %p111 = scmp.eq.s32.totalorder %s21, 1
    %p112 = por %p110, %p111
    %p114 = scmp.ne.s32.totalorder %s99, %s113
    %p115 = scmp.eq.s32.totalorder %s21, 0
    %p116 = por %p114, %p115
    %s118 = sadd.s32 %s117, 1
    %p121 = scmp.eq.s32.totalorder %s15, 1
    %p122 = scmp.ne.s32.totalorder %s117, %s119
    %p123 = scmp.eq.s32.totalorder %s15, 0
    %p124 = por %p122, %p123
    %p125 = scmp.ne.s32.totalorder %s117, %s119
    %p126 = scmp.eq.s32.totalorder %s20, 1
    %p127 = por %p125, %p126
    %p128 = scmp.ne.s32.totalorder %s119, %s120
    %p129 = scmp.eq.s32.totalorder %s20, 0
    %p130 = por %p128, %p129
    %p131 = scmp.ne.s32.totalorder %s119, %s120
    %p132 = scmp.eq.s32.totalorder %s21, 1
    %p133 = por %p131, %p132
    %p135 = scmp.ne.s32.totalorder %s120, %s134
    %p136 = scmp.eq.s32.totalorder %s21, 0
    %p137 = por %p135, %p136
    %s139 = sadd.s32 %s138, 1
    %p142 = scmp.eq.s32.totalorder %s15, 1
    %p143 = scmp.ne.s32.totalorder %s138, %s140
    %p144 = scmp.eq.s32.totalorder %s15, 0
    %p145 = por %p143, %p144
    %p146 = scmp.ne.s32.totalorder %s138, %s140
    %p147 = scmp.eq.s32.totalorder %s20, 1
    %p148 = por %p146, %p147
    %p149 = scmp.ne.s32.totalorder %s140, %s141
    %p150 = scmp.eq.s32.totalorder %s20, 0
    %p151 = por %p149, %p150
    %p152 = scmp.ne.s32.totalorder %s140, %s141
    %p153 = scmp.eq.s32.totalorder %s21, 1
    %p154 = por %p152, %p153
    %p156 = scmp.ne.s32.totalorder %s141, %s155
    %p157 = scmp.eq.s32.totalorder %s21, 0
    %p158 = por %p156, %p157
    %s159 = ssub.s32 %s15, %s22
    %p160 = scmp.eq.s32.totalorder %s159, 0
    %s162 = sadd.s32 %s161, 1
    %s163 = scalar_select %p160, %s161, %s162
    %p166 = pneg %p160
    %p167 = scmp.eq.s32.totalorder %s15, 1
    %p168 = por %p166, %p167
    %p169 = scmp.ne.s32.totalorder %s161, %s164
    %p170 = scmp.eq.s32.totalorder %s15, 0
    %p171 = por %p169, %p170
    %p172 = scmp.ne.s32.totalorder %s161, %s164
    %p173 = scmp.eq.s32.totalorder %s20, 1
    %p174 = por %p172, %p173
    %p175 = scmp.ne.s32.totalorder %s164, %s165
    %p176 = scmp.eq.s32.totalorder %s20, 0
    %p177 = por %p175, %p176
    %p178 = scmp.ne.s32.totalorder %s164, %s165
    %p179 = scmp.eq.s32.totalorder %s21, 1
    %p180 = por %p178, %p179
    %p182 = scmp.ne.s32.totalorder %s165, %s181
    %p183 = scmp.eq.s32.totalorder %s21, 0
    %p184 = por %p182, %p183
    %s186 = sadd.s32 %s185, 1
    %p189 = scmp.eq.s32.totalorder %s15, 1
    %p190 = scmp.ne.s32.totalorder %s185, %s187
    %p191 = scmp.eq.s32.totalorder %s15, 0
    %p192 = por %p190, %p191
    %p193 = scmp.ne.s32.totalorder %s185, %s187
    %p194 = scmp.eq.s32.totalorder %s20, 1
    %p195 = por %p193, %p194
    %p196 = scmp.ne.s32.totalorder %s187, %s188
    %p197 = scmp.eq.s32.totalorder %s20, 0
    %p198 = por %p196, %p197
    %p199 = scmp.ne.s32.totalorder %s187, %s188
    %p200 = scmp.eq.s32.totalorder %s21, 1
    %p201 = por %p199, %p200
    %p203 = scmp.ne.s32.totalorder %s188, %s202
    %p204 = scmp.eq.s32.totalorder %s21, 0
    %p205 = por %p203, %p204
    %s207 = sadd.s32 %s206, 1
    %p210 = scmp.eq.s32.totalorder %s15, 1
    %p211 = scmp.ne.s32.totalorder %s206, %s208
    %p212 = scmp.eq.s32.totalorder %s15, 0
    %p213 = por %p211, %p212
    %p214 = scmp.ne.s32.totalorder %s206, %s208
    %p215 = scmp.eq.s32.totalorder %s20, 1
    %p216 = por %p214, %p215
    %p217 = scmp.ne.s32.totalorder %s208, %s209
    %p218 = scmp.eq.s32.totalorder %s20, 0
    %p219 = por %p217, %p218
    %p220 = scmp.ne.s32.totalorder %s208, %s209
    %p221 = scmp.eq.s32.totalorder %s21, 1
    %p222 = por %p220, %p221
    %p224 = scmp.ne.s32.totalorder %s209, %s223
    %p225 = scmp.eq.s32.totalorder %s21, 0
    %p226 = por %p224, %p225
    %s227 = ssub.s32 %s15, %s22
    %p228 = scmp.eq.s32.totalorder %s227, 0
    %s230 = sadd.s32 %s229, 1
    %s231 = scalar_select %p228, %s229, %s230
    %p234 = pneg %p228
    %p235 = scmp.eq.s32.totalorder %s15, 1
    %p236 = por %p234, %p235
    %p237 = scmp.ne.s32.totalorder %s229, %s232
    %p238 = scmp.eq.s32.totalorder %s15, 0
    %p239 = por %p237, %p238
    %p240 = scmp.ne.s32.totalorder %s229, %s232
    %p241 = scmp.eq.s32.totalorder %s20, 1
    %p242 = por %p240, %p241
    %p243 = scmp.ne.s32.totalorder %s232, %s233
    %p244 = scmp.eq.s32.totalorder %s20, 0
    %p245 = por %p243, %p244
    %p246 = scmp.ne.s32.totalorder %s232, %s233
    %p247 = scmp.eq.s32.totalorder %s21, 1
    %p248 = por %p246, %p247
    %p250 = scmp.ne.s32.totalorder %s233, %s249
    %p251 = scmp.eq.s32.totalorder %s21, 0
    %p252 = por %p250, %p251
    %p253 = scmp.le.s32.totalorder 1, %s15
    %p254 = scmp.lt.s32.totalorder %s15, 3
    %p255 = pnand %p253, %p254
    %p256 = pneg %p255
    // Predicated region
    $region9: #{tpu_custom_call.1} parent=5 // pred_check
      _
    $region10: #{tpu_custom_call.1} parent=5 // pred_check_branch
      %258 = sbr.rel (%p255) target = $region12
    $region11: #{tpu_custom_call.1} parent=5 // pred_region
      %s259 = ssub.s32 %s15, 1
      // Predicated region
      $region13: #{tpu_custom_call.1} parent=11 // pred_check
        %p260 = pneg %p88
      $region14: #{tpu_custom_call.1} parent=11 // pred_check_branch
        %262 = sbr.rel (%p260) target = $region16
      $region15: #{tpu_custom_call.1} parent=11 // pred_region
        _
      $region16: #{tpu_custom_call.1} parent=11 // pred_fallthru
        _
      // Predicated region
      $region17: #{tpu_custom_call.1} parent=11 // pred_check
        %p263 = pneg %p109
      $region18: #{tpu_custom_call.1} parent=11 // pred_check_branch
        %265 = sbr.rel (%p263) target = $region20
      $region19: #{tpu_custom_call.1} parent=11 // pred_region
        _
      $region20: #{tpu_custom_call.1} parent=11 // pred_fallthru
        _
      // Predicated region
      $region21: #{tpu_custom_call.1} parent=11 // pred_check
        %p266 = pneg %p130
      $region22: #{tpu_custom_call.1} parent=11 // pred_check_branch
        %268 = sbr.rel (%p266) target = $region24
      $region23: #{tpu_custom_call.1} parent=11 // pred_region
        _
      $region24: #{tpu_custom_call.1} parent=11 // pred_fallthru
        _
      // Predicated region
      $region25: #{tpu_custom_call.1} parent=11 // pred_check
        %p269 = pneg %p151
      $region26: #{tpu_custom_call.1} parent=11 // pred_check_branch
        %271 = sbr.rel (%p269) target = $region28
      $region27: #{tpu_custom_call.1} parent=11 // pred_region
        _
      $region28: #{tpu_custom_call.1} parent=11 // pred_fallthru
        _
      // Predicated region
      $region29: #{tpu_custom_call.1} parent=11 // pred_check
        %p272 = pneg %p198
      $region30: #{tpu_custom_call.1} parent=11 // pred_check_branch
        %274 = sbr.rel (%p272) target = $region32
      $region31: #{tpu_custom_call.1} parent=11 // pred_region
        _
      $region32: #{tpu_custom_call.1} parent=11 // pred_fallthru
        _
      // Predicated region
      $region33: #{tpu_custom_call.1} parent=11 // pred_check
        %p275 = pneg %p219
      $region34: #{tpu_custom_call.1} parent=11 // pred_check_branch
        %277 = sbr.rel (%p275) target = $region36
      $region35: #{tpu_custom_call.1} parent=11 // pred_region
        _
      $region36: #{tpu_custom_call.1} parent=11 // pred_fallthru
        _
    $region12: #{tpu_custom_call.1} parent=5 // pred_fallthru
      _
    %p278 = scmp.lt.s32.totalorder %s15, 2
    // Predicated region
    $region37: #{tpu_custom_call.1} parent=5 // pred_check
      %p279 = pneg %p278
    $region38: #{tpu_custom_call.1} parent=5 // pred_check_branch
      %281 = sbr.rel (%p279) target = $region40
    $region39: #{tpu_custom_call.1} parent=5 // pred_region
      // Predicated region
      $region41: #{tpu_custom_call.1} parent=39 // pred_check
        %p282 = pneg %p35
      $region42: #{tpu_custom_call.1} parent=39 // pred_check_branch
        %284 = sbr.rel (%p282) target = $region44
      $region43: #{tpu_custom_call.1} parent=39 // pred_region
        %p285 = scmp.lt.s32.totalorder %s15, 1
        %s286 = scalar_select %p285, %s15, 1
        %s287 = smul.addr %s286, 2
        %s288 = smul.addr %s287, 8
        %s289 = scalar_lea.vmem %s0, %s288
      $region44: #{tpu_custom_call.1} parent=39 // pred_fallthru
        _
      // Predicated region
      $region45: #{tpu_custom_call.1} parent=39 // pred_check
        %p290 = pneg %p61
      $region46: #{tpu_custom_call.1} parent=39 // pred_check_branch
        %292 = sbr.rel (%p290) target = $region48
      $region47: #{tpu_custom_call.1} parent=39 // pred_region
        %p293 = scmp.lt.s32.totalorder %s15, 1
        %s294 = scalar_select %p293, %s15, 1
        %s295 = smul.addr %s294, 2
        %s296 = smul.addr %s295, 8
        %s297 = scalar_lea.vmem %s1, %s296
      $region48: #{tpu_custom_call.1} parent=39 // pred_fallthru
        _
      // Predicated region
      $region49: #{tpu_custom_call.1} parent=39 // pred_check
        %p298 = pneg %p171
      $region50: #{tpu_custom_call.1} parent=39 // pred_check_branch
        %300 = sbr.rel (%p298) target = $region52
      $region51: #{tpu_custom_call.1} parent=39 // pred_region
        %p301 = scmp.lt.s32.totalorder %s15, 1
        %s302 = scalar_select %p301, %s15, 1
        %s303 = scalar_lea.vmem %s6, %s302
      $region52: #{tpu_custom_call.1} parent=39 // pred_fallthru
        _
    $region40: #{tpu_custom_call.1} parent=5 // pred_fallthru
      _
    %p304 = scmp.le.s32.totalorder 1, %s15
    %p305 = scmp.lt.s32.totalorder %s15, 3
    %p306 = pnand %p304, %p305
    %p307 = pneg %p306
    // Predicated region
    $region53: #{tpu_custom_call.1} parent=5 // pred_check
      _
    $region54: #{tpu_custom_call.1} parent=5 // pred_check_branch
      %309 = sbr.rel (%p306) target = $region56
    $region55: #{tpu_custom_call.1} parent=5 // pred_region
      %s310 = ssub.s32 %s15, 1
      %p311 = scmp.lt.s32.totalorder %s20, 1
      %s312 = scalar_select %p311, %s20, 1
      %s313 = smul.addr %s312, 2
      %s314 = smul.addr %s313, 8
      %s315 = scalar_lea.vmem %s0, %s314
      %p316 = pneg %p41
      %p317 = pneg %p38
      %p318 = scmp.lt.s32.totalorder %s20, 1
      %s319 = scalar_select %p318, %s20, 1
      %s320 = smul.addr %s319, 2
      %s321 = smul.addr %s320, 8
      %s322 = scalar_lea.vmem %s1, %s321
      %p323 = pneg %p67
      %p324 = pneg %p64
      %p325 = pneg %p88
      %p326 = pneg %p85
      %p327 = pneg %p109
      %p328 = pneg %p106
      %p329 = pneg %p130
      %p330 = pneg %p127
      %p331 = pneg %p151
      %p332 = pneg %p148
      %p333 = scmp.lt.s32.totalorder %s20, 1
      %s334 = scalar_select %p333, %s20, 1
      %s335 = scalar_lea.vmem %s6, %s334
      %p336 = pneg %p177
      %p337 = pneg %p174
      %p338 = pneg %p198
      %p339 = pneg %p195
      %p340 = pneg %p219
      %p341 = pneg %p216
      %p342 = pneg %p245
      %p343 = pneg %p242
      %p344 = scmp.lt.s32.totalorder %s20, 1
      %s345 = scalar_select %p344, %s20, 1
      %s346 = smul.addr %s345, 2
      %s347 = smul.addr %s346, 8
      %s348 = scalar_lea.vmem %s9, %s347
      %p349 = scmp.lt.s32.totalorder %s20, 1
      %s350 = scalar_select %p349, %s20, 1
      %s351 = smul.addr %s350, 2
      %s352 = smul.addr %s351, 8
      %s353 = scalar_lea.vmem %s0, %s352
      %p354 = scmp.lt.s32.totalorder %s20, 1
      %s355 = scalar_select %p354, %s20, 1
      %s356 = smul.addr %s355, 2
      %s357 = smul.addr %s356, 8
      %s358 = scalar_lea.vmem %s1, %s357
      %p359 = scmp.lt.s32.totalorder %s20, 1
      %s360 = scalar_select %p359, %s20, 1
      %s361 = scalar_lea.vmem %s6, %s360
      %p362 = scmp.lt.s32.totalorder %s20, 1
      %s363 = scalar_select %p362, %s20, 1
      %s364 = smul.addr %s363, 2
      %s365 = smul.addr %s364, 8
      %s366 = scalar_lea.vmem %s9, %s365
      %v368 = vld [vmem:[%s353] sm:$0xff]
      %v369 = vld [vmem:[%s353 + $0x8] sm:$0x3]
      %v370 = vpack.c.bf16 %v369, %v368
      %v371 = vld [vmem:[%s2] sm:$0xf]
      %v372 = vld [vmem:[%s2 + $0x4] sm:$0xf]
      %v373 = vld [vmem:[%s2 + $0x8] sm:$0xf]
      %v374 = vld [vmem:[%s2 + $0xc] sm:$0xf]
      %v375 = vld [vmem:[%s3] sm:$0x1]
      %v377 = vlaneseq
      %v378 = vshrl.u32 %v377, 7
      %v379 = vsub.s32 0, %v378
      %v380 = vrot.slane %v375, %v379
      %v386 = vunpack.c.l.b16 %v371
      %v387 = vunpack.c.l.b16 %v372
      %v388 = vunpack.c.l.b16 %v373
      %v389 = vunpack.c.l.b16 %v374
      %v390 = vpack.c.b16 %v387, %v386
      %v391 = vpack.c.b16 %v389, %v388
      %vm394 = vcmask 261120
      %v396 = vsel %vm394, %v370, 0
      %398 = vmatprep.subr.bf16.mxu0 0
      %399 = vmatpush1.bf16.msra.mxu0 %v390
      %400 = vmatprep.subr.bf16.mxu0 0
      %401 = vmatpush1.bf16.msra.mxu0 %v391
      %402 = vmatprep.subr.bf16.mxu0 0
      %403 = vmatpush1.bf16.msra.mxu0 0
      %404 = vmatprep.subr.bf16.mxu0 0
      %405 = vmatpush1.bf16.msra.mxu0 0
      %406 = vmatprep.subr.bf16.mxu0 0
      %407 = vmatpush1.bf16.msra.mxu0 0
      %408 = vmatprep.subr.bf16.mxu0 0
      %409 = vmatpush1.bf16.msra.mxu0 0
      %410 = vmatprep.subr.bf16.mxu0 0
      %411 = vmatpush1.bf16.msra.mxu0 0
      %412 = vmatprep.subr.bf16.mxu0 0
      %413 = vmatpush1.bf16.msra.mxu0 0
      %414 = vmatprep.subr.bf16.mxu0 0
      %415 = vmatpush1.bf16.msra.mxu0 0
      %416 = vmatprep.subr.bf16.mxu0 0
      %417 = vmatpush1.bf16.msra.mxu0 0
      %418 = vmatprep.subr.bf16.mxu0 0
      %419 = vmatpush1.bf16.msra.mxu0 0
      %420 = vmatprep.subr.bf16.mxu0 0
      %421 = vmatpush1.bf16.msra.mxu0 0
      %422 = vmatprep.subr.bf16.mxu0 0
      %423 = vmatpush1.bf16.msra.mxu0 0
      %424 = vmatprep.subr.bf16.mxu0 0
      %425 = vmatpush1.bf16.msra.mxu0 0
      %426 = vmatprep.subr.bf16.mxu0 0
      %427 = vmatpush1.bf16.msra.mxu0 0
      %428 = vmatprep.subr.bf16.mxu0 0
      %429 = vmatpush1.bf16.msra.mxu0 0
      %430 = vmatprep.mubr.bf16.mxu0 0
      %431 = vmatmul.mubr.bf16.gmra.mrb[0].mxu0 %v396
      %v432 = vpop.f32.mrb[0].mxu0
      %v433 = vadd.f32 %v380, %v432
      %v434 = vpop.f32.mrb[0].mxu0
      %v435 = vpop.f32.mrb[0].mxu0
      %v436 = vadd.f32 %v380, %v435
      %v437 = vpop.f32.mrb[0].mxu0
      %438 = vdwg.mxu0
      %v439 = vld [vmem:[%s361] sm:$0x1]
      %v440 = vld [vmem:[%s4] sm:$0xf]
      %v441 = vld [vmem:[%s4 + $0x4] sm:$0xf]
      %v442 = vld [vmem:[%s4 + $0x8] sm:$0xf]
      %v443 = vld [vmem:[%s4 + $0xc] sm:$0xf]
      %v444 = vpack.c.bf16 %v436, %v433
      %447 = vrot.lane.b32.xlu0 %v433, 96
      %v448 = vpop.permute.xlu0 %447
      %449 = vrot.lane.b32.xlu0 %v436, 96
      %v450 = vpop.permute.xlu0 %449
      %453 = vxpose.xlu0.b32.start [1/16] %v448, 128
      %454 = vxpose.xlu0.b32.cont [2/16] %v450, 128
      %455 = vxpose.xlu0.b32.cont [3/16] 0.0, 128
      %456 = vxpose.xlu0.b32.cont [4/16] 0.0, 128
      %457 = vxpose.xlu0.b32.cont [5/16] 0.0, 128
      %458 = vxpose.xlu0.b32.cont [6/16] 0.0, 128
      %459 = vxpose.xlu0.b32.cont [7/16] 0.0, 128
      %460 = vxpose.xlu0.b32.cont [8/16] 0.0, 128
      %461 = vxpose.xlu0.b32.cont [9/16] 0.0, 128
      %462 = vxpose.xlu0.b32.cont [10/16] 0.0, 128
      %463 = vxpose.xlu0.b32.cont [11/16] 0.0, 128
      %464 = vxpose.xlu0.b32.cont [12/16] 0.0, 128
      %465 = vxpose.xlu0.b32.cont [13/16] 0.0, 128
      %466 = vxpose.xlu0.b32.cont [14/16] 0.0, 128
      %467 = vxpose.xlu0.b32.cont [15/16] 0.0, 128
      %468 = vxpose.xlu0.b32.end [16/16] 0.0, 128
      %v469 = vpop.trf.xlu0
      %v470 = vpop.trf.xlu0
      %v471 = vpop.trf.xlu0
      %v472 = vpop.trf.xlu0
      %v473 = vpop.trf.xlu0
      %v474 = vpop.trf.xlu0
      %v475 = vpop.trf.xlu0
      %v476 = vpop.trf.xlu0
      %v477 = vpop.trf.xlu0
      %v478 = vpop.trf.xlu0
      %v479 = vpop.trf.xlu0
      %v480 = vpop.trf.xlu0
      %v481 = vpop.trf.xlu0
      %v482 = vpop.trf.xlu0
      %v483 = vpop.trf.xlu0
      %v484 = vpop.trf.xlu0
      %v485 = vpack.c.bf16 %v469, %v469
      %vm486 = vcmask 64512
      %v488 = vsel %vm486, %v444, 0
      %vm490 = vcmask 1043456
      %v492 = vsel %vm490, %v485, 0
      %494 = vmatprep.subr.bf16.mxu0 0
      %495 = vmatpush1.bf16.msra.mxu0 %v492
      %496 = vmatprep.subr.bf16.mxu0 0
      %497 = vmatpush1.bf16.msra.mxu0 0
      %498 = vmatprep.subr.bf16.mxu0 0
      %499 = vmatpush1.bf16.msra.mxu0 0
      %500 = vmatprep.subr.bf16.mxu0 0
      %501 = vmatpush1.bf16.msra.mxu0 0
      %502 = vmatprep.subr.bf16.mxu0 0
      %503 = vmatpush1.bf16.msra.mxu0 0
      %504 = vmatprep.subr.bf16.mxu0 0
      %505 = vmatpush1.bf16.msra.mxu0 0
      %506 = vmatprep.subr.bf16.mxu0 0
      %507 = vmatpush1.bf16.msra.mxu0 0
      %508 = vmatprep.subr.bf16.mxu0 0
      %509 = vmatpush1.bf16.msra.mxu0 0
      %510 = vmatprep.subr.bf16.mxu0 0
      %511 = vmatpush1.bf16.msra.mxu0 0
      %512 = vmatprep.subr.bf16.mxu0 0
      %513 = vmatpush1.bf16.msra.mxu0 0
      %514 = vmatprep.subr.bf16.mxu0 0
      %515 = vmatpush1.bf16.msra.mxu0 0
      %516 = vmatprep.subr.bf16.mxu0 0
      %517 = vmatpush1.bf16.msra.mxu0 0
      %518 = vmatprep.subr.bf16.mxu0 0
      %519 = vmatpush1.bf16.msra.mxu0 0
      %520 = vmatprep.subr.bf16.mxu0 0
      %521 = vmatpush1.bf16.msra.mxu0 0
      %522 = vmatprep.subr.bf16.mxu0 0
      %523 = vmatpush1.bf16.msra.mxu0 0
      %524 = vmatprep.subr.bf16.mxu0 0
      %525 = vmatpush1.bf16.msra.mxu0 0
      %526 = vmatprep.mubr.bf16.mxu0 0
      %527 = vmatmul.mubr.bf16.gmra.mrb[0].mxu0 %v488
      %v528 = vpop.f32.mrb[0].mxu0
      %v529 = vadd.f32 0.0, %v528
      %v530 = vpop.f32.mrb[0].mxu0
      %v531 = vpop.f32.mrb[0].mxu0
      %v532 = vadd.f32 0.0, %v531
      %v533 = vpop.f32.mrb[0].mxu0
      %534 = vdwg.mxu0
      %v535 = vmul.f32 %v529, 0.35355338
      %v536 = vmul.f32 %v532, 0.35355338
      %v538 = vlaneseq
      %v539 = vshrl.u32 %v538, 7
      %v540 = vsub.s32 0, %v539
      %v541 = vrot.slane %v439, %v540
      %v543 = vadd.f32 %v535, %v541
      %v544 = vadd.f32 %v536, %v541
      %vm545 = vcmask 80896
      %v546 = vsel %vm545, %v543, -inf
      %547 = vmax.xlane.f32.xlu0 %v546
      %v548 = vpop.xlane.xlu0 %547
      %vm549 = vcmask 74752
      %v550 = vsel %vm549, %v544, -inf
      %551 = vmax.xlane.f32.xlu0 %v550
      %v552 = vpop.xlane.xlu0 %551
      %v553 = vsub.f32 %v543, %v548
      %v554 = vsub.f32 %v544, %v552
      %v555 = vmul.f32 %v553, 1.442695
      %v556 = vpow.pop %v555
      %v557 = vmul.f32 %v554, 1.442695
      %v558 = vpow.pop %v557
      %v559 = vsel %vm545, %v556, 0.0
      %560 = vadd.xlane.f32.xlu0 %v559
      %v561 = vpop.xlane.xlu0 %560
      %v562 = vsel %vm549, %v558, 0.0
      %563 = vadd.xlane.f32.xlu0 %v562
      %v564 = vpop.xlane.xlu0 %563
      %v565 = vrcp.pop %v561
      %v566 = vrcp.pop %v564
      %v567 = vmul.f32 %v556, %v565
      %v568 = vmul.f32 %v558, %v566
      %v569 = vpack.c.bf16 %v568, %v567
      %571 = vrot.lane.b32.xlu0 %v444, 64
      %v572 = vpop.permute.xlu0 %571
      %v574 = vsel %vm545, %v569, 0
      %vm576 = vcmask 1044480
      %v578 = vsel %vm576, %v572, 0
      %580 = vmatprep.subr.bf16.mxu0 0
      %581 = vmatpush1.bf16.msra.mxu0 %v578
      %582 = vmatprep.subr.bf16.mxu0 0
      %583 = vmatpush1.bf16.msra.mxu0 0
      %584 = vmatprep.subr.bf16.mxu0 0
      %585 = vmatpush1.bf16.msra.mxu0 0
      %586 = vmatprep.subr.bf16.mxu0 0
      %587 = vmatpush1.bf16.msra.mxu0 0
      %588 = vmatprep.subr.bf16.mxu0 0
      %589 = vmatpush1.bf16.msra.mxu0 0
      %590 = vmatprep.subr.bf16.mxu0 0
      %591 = vmatpush1.bf16.msra.mxu0 0
      %592 = vmatprep.subr.bf16.mxu0 0
      %593 = vmatpush1.bf16.msra.mxu0 0
      %594 = vmatprep.subr.bf16.mxu0 0
      %595 = vmatpush1.bf16.msra.mxu0 0
      %596 = vmatprep.subr.bf16.mxu0 0
      %597 = vmatpush1.bf16.msra.mxu0 0
      %598 = vmatprep.subr.bf16.mxu0 0
      %599 = vmatpush1.bf16.msra.mxu0 0
      %600 = vmatprep.subr.bf16.mxu0 0
      %601 = vmatpush1.bf16.msra.mxu0 0
      %602 = vmatprep.subr.bf16.mxu0 0
      %603 = vmatpush1.bf16.msra.mxu0 0
      %604 = vmatprep.subr.bf16.mxu0 0
      %605 = vmatpush1.bf16.msra.mxu0 0
      %606 = vmatprep.subr.bf16.mxu0 0
      %607 = vmatpush1.bf16.msra.mxu0 0
      %608 = vmatprep.subr.bf16.mxu0 0
      %609 = vmatpush1.bf16.msra.mxu0 0
      %610 = vmatprep.subr.bf16.mxu0 0
      %611 = vmatpush1.bf16.msra.mxu0 0
      %612 = vmatprep.mubr.bf16.mxu0 0
      %613 = vmatmul.mubr.bf16.gmra.mrb[0].mxu0 %v574
      %v614 = vpop.f32.mrb[0].mxu0
      %v615 = vadd.f32 0.0, %v614
      %v616 = vpop.f32.mrb[0].mxu0
      %v617 = vpop.f32.mrb[0].mxu0
      %v618 = vadd.f32 0.0, %v617
      %v619 = vpop.f32.mrb[0].mxu0
      %620 = vdwg.mxu0
      %v621 = vpack.c.bf16 %v618, %v615
      %622 = vrot.lane.b32.xlu0 %v433, 88
      %v623 = vpop.permute.xlu0 %622
      %624 = vrot.lane.b32.xlu0 %v436, 88
      %v625 = vpop.permute.xlu0 %624
      %628 = vxpose.xlu0.b32.start [1/16] %v623, 128
      %629 = vxpose.xlu0.b32.cont [2/16] %v625, 128
      %630 = vxpose.xlu0.b32.cont [3/16] 0.0, 128
      %631 = vxpose.xlu0.b32.cont [4/16] 0.0, 128
      %632 = vxpose.xlu0.b32.cont [5/16] 0.0, 128
      %633 = vxpose.xlu0.b32.cont [6/16] 0.0, 128
      %634 = vxpose.xlu0.b32.cont [7/16] 0.0, 128
      %635 = vxpose.xlu0.b32.cont [8/16] 0.0, 128
      %636 = vxpose.xlu0.b32.cont [9/16] 0.0, 128
      %637 = vxpose.xlu0.b32.cont [10/16] 0.0, 128
      %638 = vxpose.xlu0.b32.cont [11/16] 0.0, 128
      %639 = vxpose.xlu0.b32.cont [12/16] 0.0, 128
      %640 = vxpose.xlu0.b32.cont [13/16] 0.0, 128
      %641 = vxpose.xlu0.b32.cont [14/16] 0.0, 128
      %642 = vxpose.xlu0.b32.cont [15/16] 0.0, 128
      %643 = vxpose.xlu0.b32.end [16/16] 0.0, 128
      %v644 = vpop.trf.xlu0
      %v645 = vpop.trf.xlu0
      %v646 = vpop.trf.xlu0
      %v647 = vpop.trf.xlu0
      %v648 = vpop.trf.xlu0
      %v649 = vpop.trf.xlu0
      %v650 = vpop.trf.xlu0
      %v651 = vpop.trf.xlu0
      %v652 = vpop.trf.xlu0
      %v653 = vpop.trf.xlu0
      %v654 = vpop.trf.xlu0
      %v655 = vpop.trf.xlu0
      %v656 = vpop.trf.xlu0
      %v657 = vpop.trf.xlu0
      %v658 = vpop.trf.xlu0
      %v659 = vpop.trf.xlu0
      %v660 = vpack.c.bf16 %v644, %v644
      %661 = vrot.lane.b32.xlu0 %v444, 120
      %v662 = vpop.permute.xlu0 %661
      %v664 = vsel %vm486, %v662, 0
      %v667 = vsel %vm490, %v660, 0
      %669 = vmatprep.subr.bf16.mxu0 0
      %670 = vmatpush1.bf16.msra.mxu0 %v667
      %671 = vmatprep.subr.bf16.mxu0 0
      %672 = vmatpush1.bf16.msra.mxu0 0
      %673 = vmatprep.subr.bf16.mxu0 0
      %674 = vmatpush1.bf16.msra.mxu0 0
      %675 = vmatprep.subr.bf16.mxu0 0
      %676 = vmatpush1.bf16.msra.mxu0 0
      %677 = vmatprep.subr.bf16.mxu0 0
      %678 = vmatpush1.bf16.msra.mxu0 0
      %679 = vmatprep.subr.bf16.mxu0 0
      %680 = vmatpush1.bf16.msra.mxu0 0
      %681 = vmatprep.subr.bf16.mxu0 0
      %682 = vmatpush1.bf16.msra.mxu0 0
      %683 = vmatprep.subr.bf16.mxu0 0
      %684 = vmatpush1.bf16.msra.mxu0 0
      %685 = vmatprep.subr.bf16.mxu0 0
      %686 = vmatpush1.bf16.msra.mxu0 0
      %687 = vmatprep.subr.bf16.mxu0 0
      %688 = vmatpush1.bf16.msra.mxu0 0
      %689 = vmatprep.subr.bf16.mxu0 0
      %690 = vmatpush1.bf16.msra.mxu0 0
      %691 = vmatprep.subr.bf16.mxu0 0
      %692 = vmatpush1.bf16.msra.mxu0 0
      %693 = vmatprep.subr.bf16.mxu0 0
      %694 = vmatpush1.bf16.msra.mxu0 0
      %695 = vmatprep.subr.bf16.mxu0 0
      %696 = vmatpush1.bf16.msra.mxu0 0
      %697 = vmatprep.subr.bf16.mxu0 0
      %698 = vmatpush1.bf16.msra.mxu0 0
      %699 = vmatprep.subr.bf16.mxu0 0
      %700 = vmatpush1.bf16.msra.mxu0 0
      %701 = vmatprep.mubr.bf16.mxu0 0
      %702 = vmatmul.mubr.bf16.gmra.mrb[0].mxu0 %v664
      %v703 = vpop.f32.mrb[0].mxu0
      %v704 = vadd.f32 0.0, %v703
      %v705 = vpop.f32.mrb[0].mxu0
      %v706 = vpop.f32.mrb[0].mxu0
      %v707 = vadd.f32 0.0, %v706
      %v708 = vpop.f32.mrb[0].mxu0
      %709 = vdwg.mxu0
      %v710 = vmul.f32 %v704, 0.35355338
      %v711 = vmul.f32 %v707, 0.35355338
      %v712 = vadd.f32 %v710, %v541
      %v713 = vadd.f32 %v711, %v541
      %v714 = vsel %vm545, %v712, -inf
      %715 = vmax.xlane.f32.xlu0 %v714
      %v716 = vpop.xlane.xlu0 %715
      %v717 = vsel %vm549, %v713, -inf
      %718 = vmax.xlane.f32.xlu0 %v717
      %v719 = vpop.xlane.xlu0 %718
      %v720 = vsub.f32 %v712, %v716
      %v721 = vsub.f32 %v713, %v719
      %v722 = vmul.f32 %v720, 1.442695
      %v723 = vpow.pop %v722
      %v724 = vmul.f32 %v721, 1.442695
      %v725 = vpow.pop %v724
      %v726 = vsel %vm545, %v723, 0.0
      %727 = vadd.xlane.f32.xlu0 %v726
      %v728 = vpop.xlane.xlu0 %727
      %v729 = vsel %vm549, %v725, 0.0
      %730 = vadd.xlane.f32.xlu0 %v729
      %v731 = vpop.xlane.xlu0 %730
      %v732 = vrcp.pop %v728
      %v733 = vrcp.pop %v731
      %v734 = vmul.f32 %v723, %v732
      %v735 = vmul.f32 %v725, %v733
      %v736 = vpack.c.bf16 %v735, %v734
      %737 = vrot.lane.b32.xlu0 %v444, 56
      %v738 = vpop.permute.xlu0 %737
      %v740 = vsel %vm545, %v736, 0
      %v743 = vsel %vm576, %v738, 0
      %745 = vmatprep.subr.bf16.mxu0 0
      %746 = vmatpush1.bf16.msra.mxu0 %v743
      %747 = vmatprep.subr.bf16.mxu0 0
      %748 = vmatpush1.bf16.msra.mxu0 0
      %749 = vmatprep.subr.bf16.mxu0 0
      %750 = vmatpush1.bf16.msra.mxu0 0
      %751 = vmatprep.subr.bf16.mxu0 0
      %752 = vmatpush1.bf16.msra.mxu0 0
      %753 = vmatprep.subr.bf16.mxu0 0
      %754 = vmatpush1.bf16.msra.mxu0 0
      %755 = vmatprep.subr.bf16.mxu0 0
      %756 = vmatpush1.bf16.msra.mxu0 0
      %757 = vmatprep.subr.bf16.mxu0 0
      %758 = vmatpush1.bf16.msra.mxu0 0
      %759 = vmatprep.subr.bf16.mxu0 0
      %760 = vmatpush1.bf16.msra.mxu0 0
      %761 = vmatprep.subr.bf16.mxu0 0
      %762 = vmatpush1.bf16.msra.mxu0 0
      %763 = vmatprep.subr.bf16.mxu0 0
      %764 = vmatpush1.bf16.msra.mxu0 0
      %765 = vmatprep.subr.bf16.mxu0 0
      %766 = vmatpush1.bf16.msra.mxu0 0
      %767 = vmatprep.subr.bf16.mxu0 0
      %768 = vmatpush1.bf16.msra.mxu0 0
      %769 = vmatprep.subr.bf16.mxu0 0
      %770 = vmatpush1.bf16.msra.mxu0 0
      %771 = vmatprep.subr.bf16.mxu0 0
      %772 = vmatpush1.bf16.msra.mxu0 0
      %773 = vmatprep.subr.bf16.mxu0 0
      %774 = vmatpush1.bf16.msra.mxu0 0
      %775 = vmatprep.subr.bf16.mxu0 0
      %776 = vmatpush1.bf16.msra.mxu0 0
      %777 = vmatprep.mubr.bf16.mxu0 0
      %778 = vmatmul.mubr.bf16.gmra.mrb[0].mxu0 %v740
      %v779 = vpop.f32.mrb[0].mxu0
      %v780 = vadd.f32 0.0, %v779
      %v781 = vpop.f32.mrb[0].mxu0
      %v782 = vpop.f32.mrb[0].mxu0
      %v783 = vadd.f32 0.0, %v782
      %v784 = vpop.f32.mrb[0].mxu0
      %785 = vdwg.mxu0
      %v786 = vpack.c.bf16 %v783, %v780
      %v788 = vsel %vm486, %v786, 0
      %v791 = vsel %vm490, %v441, 0
      %793 = vmatprep.subr.bf16.mxu0 0
      %794 = vmatpush1.bf16.msra.mxu0 %v791
      %795 = vmatprep.subr.bf16.mxu0 0
      %796 = vmatpush1.bf16.msra.mxu0 0
      %797 = vmatprep.subr.bf16.mxu0 0
      %798 = vmatpush1.bf16.msra.mxu0 0
      %799 = vmatprep.subr.bf16.mxu0 0
      %800 = vmatpush1.bf16.msra.mxu0 0
      %801 = vmatprep.subr.bf16.mxu0 0
      %802 = vmatpush1.bf16.msra.mxu0 0
      %803 = vmatprep.subr.bf16.mxu0 0
      %804 = vmatpush1.bf16.msra.mxu0 0
      %805 = vmatprep.subr.bf16.mxu0 0
      %806 = vmatpush1.bf16.msra.mxu0 0
      %807 = vmatprep.subr.bf16.mxu0 0
      %808 = vmatpush1.bf16.msra.mxu0 0
      %809 = vmatprep.subr.bf16.mxu0 0
      %810 = vmatpush1.bf16.msra.mxu0 0
      %811 = vmatprep.subr.bf16.mxu0 0
      %812 = vmatpush1.bf16.msra.mxu0 0
      %813 = vmatprep.subr.bf16.mxu0 0
      %814 = vmatpush1.bf16.msra.mxu0 0
      %815 = vmatprep.subr.bf16.mxu0 0
      %816 = vmatpush1.bf16.msra.mxu0 0
      %817 = vmatprep.subr.bf16.mxu0 0
      %818 = vmatpush1.bf16.msra.mxu0 0
      %819 = vmatprep.subr.bf16.mxu0 0
      %820 = vmatpush1.bf16.msra.mxu0 0
      %821 = vmatprep.subr.bf16.mxu0 0
      %822 = vmatpush1.bf16.msra.mxu0 0
      %823 = vmatprep.subr.bf16.mxu0 0
      %824 = vmatpush1.bf16.msra.mxu0 0
      %825 = vmatprep.mubr.bf16.mxu0 0
      %826 = vmatmul.mubr.bf16.gmra.mrb[0].mxu0 %v788
      %v827 = vpop.f32.mrb[0].mxu0
      %v828 = vadd.f32 0.0, %v827
      %v829 = vpop.f32.mrb[0].mxu0
      %v830 = vpop.f32.mrb[0].mxu0
      %v831 = vadd.f32 0.0, %v830
      %v832 = vpop.f32.mrb[0].mxu0
      %833 = vdwg.mxu0
      %v835 = vsel %vm486, %v621, 0
      %v838 = vsel %vm490, %v440, 0
      %840 = vmatprep.subr.bf16.mxu0 0
      %841 = vmatpush1.bf16.msra.mxu0 %v838
      %842 = vmatprep.subr.bf16.mxu0 0
      %843 = vmatpush1.bf16.msra.mxu0 0
      %844 = vmatprep.subr.bf16.mxu0 0
      %845 = vmatpush1.bf16.msra.mxu0 0
      %846 = vmatprep.subr.bf16.mxu0 0
      %847 = vmatpush1.bf16.msra.mxu0 0
      %848 = vmatprep.subr.bf16.mxu0 0
      %849 = vmatpush1.bf16.msra.mxu0 0
      %850 = vmatprep.subr.bf16.mxu0 0
      %851 = vmatpush1.bf16.msra.mxu0 0
      %852 = vmatprep.subr.bf16.mxu0 0
      %853 = vmatpush1.bf16.msra.mxu0 0
      %854 = vmatprep.subr.bf16.mxu0 0
      %855 = vmatpush1.bf16.msra.mxu0 0
      %856 = vmatprep.subr.bf16.mxu0 0
      %857 = vmatpush1.bf16.msra.mxu0 0
      %858 = vmatprep.subr.bf16.mxu0 0
      %859 = vmatpush1.bf16.msra.mxu0 0
      %860 = vmatprep.subr.bf16.mxu0 0
      %861 = vmatpush1.bf16.msra.mxu0 0
      %862 = vmatprep.subr.bf16.mxu0 0
      %863 = vmatpush1.bf16.msra.mxu0 0
      %864 = vmatprep.subr.bf16.mxu0 0
      %865 = vmatpush1.bf16.msra.mxu0 0
      %866 = vmatprep.subr.bf16.mxu0 0
      %867 = vmatpush1.bf16.msra.mxu0 0
      %868 = vmatprep.subr.bf16.mxu0 0
      %869 = vmatpush1.bf16.msra.mxu0 0
      %870 = vmatprep.subr.bf16.mxu0 0
      %871 = vmatpush1.bf16.msra.mxu0 0
      %872 = vmatprep.mubr.bf16.mxu0 0
      %873 = vmatmul.mubr.bf16.gmra.mrb[0].mxu0 %v835
      %v874 = vpop.f32.mrb[0].mxu0
      %v875 = vadd.f32 %v828, %v874
      %v876 = vpop.f32.mrb[0].mxu0
      %v877 = vpop.f32.mrb[0].mxu0
      %v878 = vadd.f32 %v831, %v877
      %v879 = vpop.f32.mrb[0].mxu0
      %880 = vdwg.mxu0
      %881 = vrot.lane.b32.xlu0 %v433, 80
      %v882 = vpop.permute.xlu0 %881
      %883 = vrot.lane.b32.xlu0 %v436, 80
      %v884 = vpop.permute.xlu0 %883
      %887 = vxpose.xlu0.b32.start [1/16] %v882, 128
      %888 = vxpose.xlu0.b32.cont [2/16] %v884, 128
      %889 = vxpose.xlu0.b32.cont [3/16] 0.0, 128
      %890 = vxpose.xlu0.b32.cont [4/16] 0.0, 128
      %891 = vxpose.xlu0.b32.cont [5/16] 0.0, 128
      %892 = vxpose.xlu0.b32.cont [6/16] 0.0, 128
      %893 = vxpose.xlu0.b32.cont [7/16] 0.0, 128
      %894 = vxpose.xlu0.b32.cont [8/16] 0.0, 128
      %895 = vxpose.xlu0.b32.cont [9/16] 0.0, 128
      %896 = vxpose.xlu0.b32.cont [10/16] 0.0, 128
      %897 = vxpose.xlu0.b32.cont [11/16] 0.0, 128
      %898 = vxpose.xlu0.b32.cont [12/16] 0.0, 128
      %899 = vxpose.xlu0.b32.cont [13/16] 0.0, 128
      %900 = vxpose.xlu0.b32.cont [14/16] 0.0, 128
      %901 = vxpose.xlu0.b32.cont [15/16] 0.0, 128
      %902 = vxpose.xlu0.b32.end [16/16] 0.0, 128
      %v903 = vpop.trf.xlu0
      %v904 = vpop.trf.xlu0
      %v905 = vpop.trf.xlu0
      %v906 = vpop.trf.xlu0
      %v907 = vpop.trf.xlu0
      %v908 = vpop.trf.xlu0
      %v909 = vpop.trf.xlu0
      %v910 = vpop.trf.xlu0
      %v911 = vpop.trf.xlu0
      %v912 = vpop.trf.xlu0
      %v913 = vpop.trf.xlu0
      %v914 = vpop.trf.xlu0
      %v915 = vpop.trf.xlu0
      %v916 = vpop.trf.xlu0
      %v917 = vpop.trf.xlu0
      %v918 = vpop.trf.xlu0
      %v919 = vpack.c.bf16 %v903, %v903
      %920 = vrot.lane.b32.xlu0 %v444, 112
      %v921 = vpop.permute.xlu0 %920
      %v923 = vsel %vm486, %v921, 0
      %v926 = vsel %vm490, %v919, 0
      %928 = vmatprep.subr.bf16.mxu0 0
      %929 = vmatpush1.bf16.msra.mxu0 %v926
      %930 = vmatprep.subr.bf16.mxu0 0
      %931 = vmatpush1.bf16.msra.mxu0 0
      %932 = vmatprep.subr.bf16.mxu0 0
      %933 = vmatpush1.bf16.msra.mxu0 0
      %934 = vmatprep.subr.bf16.mxu0 0
      %935 = vmatpush1.bf16.msra.mxu0 0
      %936 = vmatprep.subr.bf16.mxu0 0
      %937 = vmatpush1.bf16.msra.mxu0 0
      %938 = vmatprep.subr.bf16.mxu0 0
      %939 = vmatpush1.bf16.msra.mxu0 0
      %940 = vmatprep.subr.bf16.mxu0 0
      %941 = vmatpush1.bf16.msra.mxu0 0
      %942 = vmatprep.subr.bf16.mxu0 0
      %943 = vmatpush1.bf16.msra.mxu0 0
      %944 = vmatprep.subr.bf16.mxu0 0
      %945 = vmatpush1.bf16.msra.mxu0 0
      %946 = vmatprep.subr.bf16.mxu0 0
      %947 = vmatpush1.bf16.msra.mxu0 0
      %948 = vmatprep.subr.bf16.mxu0 0
      %949 = vmatpush1.bf16.msra.mxu0 0
      %950 = vmatprep.subr.bf16.mxu0 0
      %951 = vmatpush1.bf16.msra.mxu0 0
      %952 = vmatprep.subr.bf16.mxu0 0
      %953 = vmatpush1.bf16.msra.mxu0 0
      %954 = vmatprep.subr.bf16.mxu0 0
      %955 = vmatpush1.bf16.msra.mxu0 0
      %956 = vmatprep.subr.bf16.mxu0 0
      %957 = vmatpush1.bf16.msra.mxu0 0
      %958 = vmatprep.subr.bf16.mxu0 0
      %959 = vmatpush1.bf16.msra.mxu0 0
      %960 = vmatprep.mubr.bf16.mxu0 0
      %961 = vmatmul.mubr.bf16.gmra.mrb[0].mxu0 %v923
      %v962 = vpop.f32.mrb[0].mxu0
      %v963 = vadd.f32 0.0, %v962
      %v964 = vpop.f32.mrb[0].mxu0
      %v965 = vpop.f32.mrb[0].mxu0
      %v966 = vadd.f32 0.0, %v965
      %v967 = vpop.f32.mrb[0].mxu0
      %968 = vdwg.mxu0
      %v969 = vmul.f32 %v963, 0.35355338
      %v970 = vmul.f32 %v966, 0.35355338
      %v971 = vadd.f32 %v969, %v541
      %v972 = vadd.f32 %v970, %v541
      %v973 = vsel %vm545, %v971, -inf
      %974 = vmax.xlane.f32.xlu0 %v973
      %v975 = vpop.xlane.xlu0 %974
      %v976 = vsel %vm549, %v972, -inf
      %977 = vmax.xlane.f32.xlu0 %v976
      %v978 = vpop.xlane.xlu0 %977
      %v979 = vsub.f32 %v971, %v975
      %v980 = vsub.f32 %v972, %v978
      %v981 = vmul.f32 %v979, 1.442695
      %v982 = vpow.pop %v981
      %v983 = vmul.f32 %v980, 1.442695
      %v984 = vpow.pop %v983
      %v985 = vsel %vm545, %v982, 0.0
      %986 = vadd.xlane.f32.xlu0 %v985
      %v987 = vpop.xlane.xlu0 %986
      %v988 = vsel %vm549, %v984, 0.0
      %989 = vadd.xlane.f32.xlu0 %v988
      %v990 = vpop.xlane.xlu0 %989
      %v991 = vrcp.pop %v987
      %v992 = vrcp.pop %v990
      %v993 = vmul.f32 %v982, %v991
      %v994 = vmul.f32 %v984, %v992
      %v995 = vpack.c.bf16 %v994, %v993
      %996 = vrot.lane.b32.xlu0 %v444, 48
      %v997 = vpop.permute.xlu0 %996
      %v999 = vsel %vm545, %v995, 0
      %v1002 = vsel %vm576, %v997, 0
      %1004 = vmatprep.subr.bf16.mxu0 0
      %1005 = vmatpush1.bf16.msra.mxu0 %v1002
      %1006 = vmatprep.subr.bf16.mxu0 0
      %1007 = vmatpush1.bf16.msra.mxu0 0
      %1008 = vmatprep.subr.bf16.mxu0 0
      %1009 = vmatpush1.bf16.msra.mxu0 0
      %1010 = vmatprep.subr.bf16.mxu0 0
      %1011 = vmatpush1.bf16.msra.mxu0 0
      %1012 = vmatprep.subr.bf16.mxu0 0
      %1013 = vmatpush1.bf16.msra.mxu0 0
      %1014 = vmatprep.subr.bf16.mxu0 0
      %1015 = vmatpush1.bf16.msra.mxu0 0
      %1016 = vmatprep.subr.bf16.mxu0 0
      %1017 = vmatpush1.bf16.msra.mxu0 0
      %1018 = vmatprep.subr.bf16.mxu0 0
      %1019 = vmatpush1.bf16.msra.mxu0 0
      %1020 = vmatprep.subr.bf16.mxu0 0
      %1021 = vmatpush1.bf16.msra.mxu0 0
      %1022 = vmatprep.subr.bf16.mxu0 0
      %1023 = vmatpush1.bf16.msra.mxu0 0
      %1024 = vmatprep.subr.bf16.mxu0 0
      %1025 = vmatpush1.bf16.msra.mxu0 0
      %1026 = vmatprep.subr.bf16.mxu0 0
      %1027 = vmatpush1.bf16.msra.mxu0 0
      %1028 = vmatprep.subr.bf16.mxu0 0
      %1029 = vmatpush1.bf16.msra.mxu0 0
      %1030 = vmatprep.subr.bf16.mxu0 0
      %1031 = vmatpush1.bf16.msra.mxu0 0
      %1032 = vmatprep.subr.bf16.mxu0 0
      %1033 = vmatpush1.bf16.msra.mxu0 0
      %1034 = vmatprep.subr.bf16.mxu0 0
      %1035 = vmatpush1.bf16.msra.mxu0 0
      %1036 = vmatprep.mubr.bf16.mxu0 0
      %1037 = vmatmul.mubr.bf16.gmra.mrb[0].mxu0 %v999
      %v1038 = vpop.f32.mrb[0].mxu0
      %v1039 = vadd.f32 0.0, %v1038
      %v1040 = vpop.f32.mrb[0].mxu0
      %v1041 = vpop.f32.mrb[0].mxu0
      %v1042 = vadd.f32 0.0, %v1041
      %v1043 = vpop.f32.mrb[0].mxu0
      %1044 = vdwg.mxu0
      %v1045 = vpack.c.bf16 %v1042, %v1039
      %v1047 = vsel %vm486, %v1045, 0
      %v1050 = vsel %vm490, %v442, 0
      %1052 = vmatprep.subr.bf16.mxu0 0
      %1053 = vmatpush1.bf16.msra.mxu0 %v1050
      %1054 = vmatprep.subr.bf16.mxu0 0
      %1055 = vmatpush1.bf16.msra.mxu0 0
      %1056 = vmatprep.subr.bf16.mxu0 0
      %1057 = vmatpush1.bf16.msra.mxu0 0
      %1058 = vmatprep.subr.bf16.mxu0 0
      %1059 = vmatpush1.bf16.msra.mxu0 0
      %1060 = vmatprep.subr.bf16.mxu0 0
      %1061 = vmatpush1.bf16.msra.mxu0 0
      %1062 = vmatprep.subr.bf16.mxu0 0
      %1063 = vmatpush1.bf16.msra.mxu0 0
      %1064 = vmatprep.subr.bf16.mxu0 0
      %1065 = vmatpush1.bf16.msra.mxu0 0
      %1066 = vmatprep.subr.bf16.mxu0 0
      %1067 = vmatpush1.bf16.msra.mxu0 0
      %1068 = vmatprep.subr.bf16.mxu0 0
      %1069 = vmatpush1.bf16.msra.mxu0 0
      %1070 = vmatprep.subr.bf16.mxu0 0
      %1071 = vmatpush1.bf16.msra.mxu0 0
      %1072 = vmatprep.subr.bf16.mxu0 0
      %1073 = vmatpush1.bf16.msra.mxu0 0
      %1074 = vmatprep.subr.bf16.mxu0 0
      %1075 = vmatpush1.bf16.msra.mxu0 0
      %1076 = vmatprep.subr.bf16.mxu0 0
      %1077 = vmatpush1.bf16.msra.mxu0 0
      %1078 = vmatprep.subr.bf16.mxu0 0
      %1079 = vmatpush1.bf16.msra.mxu0 0
      %1080 = vmatprep.subr.bf16.mxu0 0
      %1081 = vmatpush1.bf16.msra.mxu0 0
      %1082 = vmatprep.subr.bf16.mxu0 0
      %1083 = vmatpush1.bf16.msra.mxu0 0
      %1084 = vmatprep.mubr.bf16.mxu0 0
      %1085 = vmatmul.mubr.bf16.gmra.mrb[0].mxu0 %v1047
      %v1086 = vpop.f32.mrb[0].mxu0
      %v1087 = vadd.f32 0.0, %v1086
      %v1088 = vpop.f32.mrb[0].mxu0
      %v1089 = vpop.f32.mrb[0].mxu0
      %v1090 = vadd.f32 0.0, %v1089
      %v1091 = vpop.f32.mrb[0].mxu0
      %1092 = vdwg.mxu0
      %v1093 = vadd.f32 %v875, %v1087
      %v1094 = vadd.f32 %v878, %v1090
      %1095 = vrot.lane.b32.xlu0 %v433, 72
      %v1096 = vpop.permute.xlu0 %1095
      %1097 = vrot.lane.b32.xlu0 %v436, 72
      %v1098 = vpop.permute.xlu0 %1097
      %1101 = vxpose.xlu0.b32.start [1/16] %v1096, 128
      %1102 = vxpose.xlu0.b32.cont [2/16] %v1098, 128
      %1103 = vxpose.xlu0.b32.cont [3/16] 0.0, 128
      %1104 = vxpose.xlu0.b32.cont [4/16] 0.0, 128
      %1105 = vxpose.xlu0.b32.cont [5/16] 0.0, 128
      %1106 = vxpose.xlu0.b32.cont [6/16] 0.0, 128
      %1107 = vxpose.xlu0.b32.cont [7/16] 0.0, 128
      %1108 = vxpose.xlu0.b32.cont [8/16] 0.0, 128
      %1109 = vxpose.xlu0.b32.cont [9/16] 0.0, 128
      %1110 = vxpose.xlu0.b32.cont [10/16] 0.0, 128
      %1111 = vxpose.xlu0.b32.cont [11/16] 0.0, 128
      %1112 = vxpose.xlu0.b32.cont [12/16] 0.0, 128
      %1113 = vxpose.xlu0.b32.cont [13/16] 0.0, 128
      %1114 = vxpose.xlu0.b32.cont [14/16] 0.0, 128
      %1115 = vxpose.xlu0.b32.cont [15/16] 0.0, 128
      %1116 = vxpose.xlu0.b32.end [16/16] 0.0, 128
      %v1117 = vpop.trf.xlu0
      %v1118 = vpop.trf.xlu0
      %v1119 = vpop.trf.xlu0
      %v1120 = vpop.trf.xlu0
      %v1121 = vpop.trf.xlu0
      %v1122 = vpop.trf.xlu0
      %v1123 = vpop.trf.xlu0
      %v1124 = vpop.trf.xlu0
      %v1125 = vpop.trf.xlu0
      %v1126 = vpop.trf.xlu0
      %v1127 = vpop.trf.xlu0
      %v1128 = vpop.trf.xlu0
      %v1129 = vpop.trf.xlu0
      %v1130 = vpop.trf.xlu0
      %v1131 = vpop.trf.xlu0
      %v1132 = vpop.trf.xlu0
      %v1133 = vpack.c.bf16 %v1117, %v1117
      %1134 = vrot.lane.b32.xlu0 %v444, 104
      %v1135 = vpop.permute.xlu0 %1134
      %v1137 = vsel %vm486, %v1135, 0
      %v1140 = vsel %vm490, %v1133, 0
      %1142 = vmatprep.subr.bf16.mxu0 0
      %1143 = vmatpush1.bf16.msra.mxu0 %v1140
      %1144 = vmatprep.subr.bf16.mxu0 0
      %1145 = vmatpush1.bf16.msra.mxu0 0
      %1146 = vmatprep.subr.bf16.mxu0 0
      %1147 = vmatpush1.bf16.msra.mxu0 0
      %1148 = vmatprep.subr.bf16.mxu0 0
      %1149 = vmatpush1.bf16.msra.mxu0 0
      %1150 = vmatprep.subr.bf16.mxu0 0
      %1151 = vmatpush1.bf16.msra.mxu0 0
      %1152 = vmatprep.subr.bf16.mxu0 0
      %1153 = vmatpush1.bf16.msra.mxu0 0
      %1154 = vmatprep.subr.bf16.mxu0 0
      %1155 = vmatpush1.bf16.msra.mxu0 0
      %1156 = vmatprep.subr.bf16.mxu0 0
      %1157 = vmatpush1.bf16.msra.mxu0 0
      %1158 = vmatprep.subr.bf16.mxu0 0
      %1159 = vmatpush1.bf16.msra.mxu0 0
      %1160 = vmatprep.subr.bf16.mxu0 0
      %1161 = vmatpush1.bf16.msra.mxu0 0
      %1162 = vmatprep.subr.bf16.mxu0 0
      %1163 = vmatpush1.bf16.msra.mxu0 0
      %1164 = vmatprep.subr.bf16.mxu0 0
      %1165 = vmatpush1.bf16.msra.mxu0 0
      %1166 = vmatprep.subr.bf16.mxu0 0
      %1167 = vmatpush1.bf16.msra.mxu0 0
      %1168 = vmatprep.subr.bf16.mxu0 0
      %1169 = vmatpush1.bf16.msra.mxu0 0
      %1170 = vmatprep.subr.bf16.mxu0 0
      %1171 = vmatpush1.bf16.msra.mxu0 0
      %1172 = vmatprep.subr.bf16.mxu0 0
      %1173 = vmatpush1.bf16.msra.mxu0 0
      %1174 = vmatprep.mubr.bf16.mxu0 0
      %1175 = vmatmul.mubr.bf16.gmra.mrb[0].mxu0 %v1137
      %v1176 = vpop.f32.mrb[0].mxu0
      %v1177 = vadd.f32 0.0, %v1176
      %v1178 = vpop.f32.mrb[0].mxu0
      %v1179 = vpop.f32.mrb[0].mxu0
      %v1180 = vadd.f32 0.0, %v1179
      %v1181 = vpop.f32.mrb[0].mxu0
      %1182 = vdwg.mxu0
      %v1183 = vmul.f32 %v1177, 0.35355338
      %v1184 = vmul.f32 %v1180, 0.35355338
      %v1185 = vadd.f32 %v1183, %v541
      %v1186 = vadd.f32 %v1184, %v541
      %v1187 = vsel %vm545, %v1185, -inf
      %1188 = vmax.xlane.f32.xlu0 %v1187
      %v1189 = vpop.xlane.xlu0 %1188
      %v1190 = vsel %vm549, %v1186, -inf
      %1191 = vmax.xlane.f32.xlu0 %v1190
      %v1192 = vpop.xlane.xlu0 %1191
      %v1193 = vsub.f32 %v1185, %v1189
      %v1194 = vsub.f32 %v1186, %v1192
      %v1195 = vmul.f32 %v1193, 1.442695
      %v1196 = vpow.pop %v1195
      %v1197 = vmul.f32 %v1194, 1.442695
      %v1198 = vpow.pop %v1197
      %v1199 = vsel %vm545, %v1196, 0.0
      %1200 = vadd.xlane.f32.xlu0 %v1199
      %v1201 = vpop.xlane.xlu0 %1200
      %v1202 = vsel %vm549, %v1198, 0.0
      %1203 = vadd.xlane.f32.xlu0 %v1202
      %v1204 = vpop.xlane.xlu0 %1203
      %v1205 = vrcp.pop %v1201
      %v1206 = vrcp.pop %v1204
      %v1207 = vmul.f32 %v1196, %v1205
      %v1208 = vmul.f32 %v1198, %v1206
      %v1209 = vpack.c.bf16 %v1208, %v1207
      %1210 = vrot.lane.b32.xlu0 %v444, 40
      %v1211 = vpop.permute.xlu0 %1210
      %v1213 = vsel %vm545, %v1209, 0
      %v1216 = vsel %vm576, %v1211, 0
      %1218 = vmatprep.subr.bf16.mxu0 0
      %1219 = vmatpush1.bf16.msra.mxu0 %v1216
      %1220 = vmatprep.subr.bf16.mxu0 0
      %1221 = vmatpush1.bf16.msra.mxu0 0
      %1222 = vmatprep.subr.bf16.mxu0 0
      %1223 = vmatpush1.bf16.msra.mxu0 0
      %1224 = vmatprep.subr.bf16.mxu0 0
      %1225 = vmatpush1.bf16.msra.mxu0 0
      %1226 = vmatprep.subr.bf16.mxu0 0
      %1227 = vmatpush1.bf16.msra.mxu0 0
      %1228 = vmatprep.subr.bf16.mxu0 0
      %1229 = vmatpush1.bf16.msra.mxu0 0
      %1230 = vmatprep.subr.bf16.mxu0 0
      %1231 = vmatpush1.bf16.msra.mxu0 0
      %1232 = vmatprep.subr.bf16.mxu0 0
      %1233 = vmatpush1.bf16.msra.mxu0 0
      %1234 = vmatprep.subr.bf16.mxu0 0
      %1235 = vmatpush1.bf16.msra.mxu0 0
      %1236 = vmatprep.subr.bf16.mxu0 0
      %1237 = vmatpush1.bf16.msra.mxu0 0
      %1238 = vmatprep.subr.bf16.mxu0 0
      %1239 = vmatpush1.bf16.msra.mxu0 0
      %1240 = vmatprep.subr.bf16.mxu0 0
      %1241 = vmatpush1.bf16.msra.mxu0 0
      %1242 = vmatprep.subr.bf16.mxu0 0
      %1243 = vmatpush1.bf16.msra.mxu0 0
      %1244 = vmatprep.subr.bf16.mxu0 0
      %1245 = vmatpush1.bf16.msra.mxu0 0
      %1246 = vmatprep.subr.bf16.mxu0 0
      %1247 = vmatpush1.bf16.msra.mxu0 0
      %1248 = vmatprep.subr.bf16.mxu0 0
      %1249 = vmatpush1.bf16.msra.mxu0 0
      %1250 = vmatprep.mubr.bf16.mxu0 0
      %1251 = vmatmul.mubr.bf16.gmra.mrb[0].mxu0 %v1213
      %v1252 = vpop.f32.mrb[0].mxu0
      %v1253 = vadd.f32 0.0, %v1252
      %v1254 = vpop.f32.mrb[0].mxu0
      %v1255 = vpop.f32.mrb[0].mxu0
      %v1256 = vadd.f32 0.0, %v1255
      %v1257 = vpop.f32.mrb[0].mxu0
      %1258 = vdwg.mxu0
      %v1259 = vpack.c.bf16 %v1256, %v1253
      %v1261 = vsel %vm486, %v1259, 0
      %v1264 = vsel %vm490, %v443, 0
      %1266 = vmatprep.subr.bf16.mxu0 0
      %1267 = vmatpush1.bf16.msra.mxu0 %v1264
      %1268 = vmatprep.subr.bf16.mxu0 0
      %1269 = vmatpush1.bf16.msra.mxu0 0
      %1270 = vmatprep.subr.bf16.mxu0 0
      %1271 = vmatpush1.bf16.msra.mxu0 0
      %1272 = vmatprep.subr.bf16.mxu0 0
      %1273 = vmatpush1.bf16.msra.mxu0 0
      %1274 = vmatprep.subr.bf16.mxu0 0
      %1275 = vmatpush1.bf16.msra.mxu0 0
      %1276 = vmatprep.subr.bf16.mxu0 0
      %1277 = vmatpush1.bf16.msra.mxu0 0
      %1278 = vmatprep.subr.bf16.mxu0 0
      %1279 = vmatpush1.bf16.msra.mxu0 0
      %1280 = vmatprep.subr.bf16.mxu0 0
      %1281 = vmatpush1.bf16.msra.mxu0 0
      %1282 = vmatprep.subr.bf16.mxu0 0
      %1283 = vmatpush1.bf16.msra.mxu0 0
      %1284 = vmatprep.subr.bf16.mxu0 0
      %1285 = vmatpush1.bf16.msra.mxu0 0
      %1286 = vmatprep.subr.bf16.mxu0 0
      %1287 = vmatpush1.bf16.msra.mxu0 0
      %1288 = vmatprep.subr.bf16.mxu0 0
      %1289 = vmatpush1.bf16.msra.mxu0 0
      %1290 = vmatprep.subr.bf16.mxu0 0
      %1291 = vmatpush1.bf16.msra.mxu0 0
      %1292 = vmatprep.subr.bf16.mxu0 0
      %1293 = vmatpush1.bf16.msra.mxu0 0
      %1294 = vmatprep.subr.bf16.mxu0 0
      %1295 = vmatpush1.bf16.msra.mxu0 0
      %1296 = vmatprep.subr.bf16.mxu0 0
      %1297 = vmatpush1.bf16.msra.mxu0 0
      %1298 = vmatprep.mubr.bf16.mxu0 0
      %1299 = vmatmul.mubr.bf16.gmra.mrb[0].mxu0 %v1261
      %v1300 = vpop.f32.mrb[0].mxu0
      %v1301 = vadd.f32 0.0, %v1300
      %v1302 = vpop.f32.mrb[0].mxu0
      %v1303 = vpop.f32.mrb[0].mxu0
      %v1304 = vadd.f32 0.0, %v1303
      %v1305 = vpop.f32.mrb[0].mxu0
      %1306 = vdwg.mxu0
      %v1307 = vadd.f32 %v1093, %v1301
      %v1308 = vadd.f32 %v1094, %v1304
      %v1309 = vadd.f32 %v368, %v1307
      %v1310 = vadd.f32 %v369, %v1308
      %v1311 = vld [vmem:[%s5] sm:$0x1]
      %v1313 = vlaneseq
      %v1314 = vshrl.u32 %v1313, 7
      %v1315 = vsub.s32 0, %v1314
      %v1316 = vrot.slane %v1311, %v1315
      %v1318 = vadd.f32 %v1309, %v1316
      %v1319 = vadd.f32 %v1310, %v1316
      %v1320 = vsel %vm394, %v1318, 0.0
      %1321 = vadd.xlane.f32.xlu0 %v1320
      %v1322 = vpop.xlane.xlu0 %1321
      %vm1323 = vcmask 254976
      %v1324 = vsel %vm1323, %v1319, 0.0
      %1325 = vadd.xlane.f32.xlu0 %v1324
      %v1326 = vpop.xlane.xlu0 %1325
      %v1327 = vrcp.pop 32.0
      %v1328 = vmul.f32 %v1322, %v1327
      %v1329 = vmul.f32 %v1326, %v1327
      %v1330 = vmul.f32 %v1318, %v1318
      %v1331 = vmul.f32 %v1319, %v1319
      %v1332 = vsel %vm394, %v1330, 0.0
      %1333 = vadd.xlane.f32.xlu0 %v1332
      %v1334 = vpop.xlane.xlu0 %1333
      %v1335 = vsel %vm1323, %v1331, 0.0
      %1336 = vadd.xlane.f32.xlu0 %v1335
      %v1337 = vpop.xlane.xlu0 %1336
      %v1338 = vmul.f32 %v1334, %v1327
      %v1339 = vmul.f32 %v1337, %v1327
      %v1340 = vmul.f32 %v1328, %v1328
      %v1341 = vmul.f32 %v1329, %v1329
      %v1342 = vsub.f32 %v1338, %v1340
      %v1343 = vsub.f32 %v1339, %v1341
      %v1344 = vsub.f32 %v1318, %v1328
      %v1345 = vsub.f32 %v1319, %v1329
      %v1346 = vadd.f32 %v1342, 1e-05
      %v1347 = vadd.f32 %v1343, 1e-05
      %v1348 = vrsqrt.pop %v1346
      %v1349 = vrsqrt.pop %v1347
      %v1350 = vmul.f32 %v1344, %v1348
      %v1351 = vmul.f32 %v1345, %v1349
      %v1352 = vld [vmem:[%s7] sm:$0x1]
      %v1354 = vlaneseq
      %v1355 = vshrl.u32 %v1354, 7
      %v1356 = vsub.s32 0, %v1355
      %v1357 = vrot.slane %v1352, %v1356
      %v1359 = vmul.f32 %v1350, %v1357
      %v1360 = vmul.f32 %v1351, %v1357
      %v1361 = vld [vmem:[%s8] sm:$0x1]
      %v1363 = vlaneseq
      %v1364 = vshrl.u32 %v1363, 7
      %v1365 = vsub.s32 0, %v1364
      %v1366 = vrot.slane %v1361, %v1365
      %v1368 = vadd.f32 %v1359, %v1366
      %v1369 = vadd.f32 %v1360, %v1366
      %1370 = vst.msk [vmem:[%s366] sm:$0xff] %vm394, %v1368
      %1371 = vst.msk [vmem:[%s366 + $0x8] sm:$0x3] %vm1323, %v1369
      %p1372 = scmp.lt.s32.totalorder %s20, 1
      %s1373 = scalar_select %p1372, %s20, 1
      %s1374 = smul.addr %s1373, 2
      %s1375 = smul.addr %s1374, 8
      %s1376 = scalar_lea.vmem %s9, %s1375
      // Predicated region
      $region57: #{tpu_custom_call.1} parent=55 // pred_check
        %p1377 = pneg %p242
      $region58: #{tpu_custom_call.1} parent=55 // pred_check_branch
        %1379 = sbr.rel (%p1377) target = $region60
      $region59: #{tpu_custom_call.1} parent=55 // pred_region
        _
      $region60: #{tpu_custom_call.1} parent=55 // pred_fallthru
        _
    $region56: #{tpu_custom_call.1} parent=5 // pred_fallthru
      _
    %p1380 = scmp.le.s32.totalorder 2, %s15
    // Predicated region
    $region61: #{tpu_custom_call.1} parent=5 // pred_check
      %p1381 = pneg %p1380
    $region62: #{tpu_custom_call.1} parent=5 // pred_check_branch
      %1383 = sbr.rel (%p1381) target = $region64
    $region63: #{tpu_custom_call.1} parent=5 // pred_region
      %s1384 = ssub.s32 %s15, 2
      // Predicated region
      $region65: #{tpu_custom_call.1} parent=63 // pred_check
        %p1385 = pneg %p248
      $region66: #{tpu_custom_call.1} parent=63 // pred_check_branch
        %1387 = sbr.rel (%p1385) target = $region68
      $region67: #{tpu_custom_call.1} parent=63 // pred_region
        %p1388 = scmp.lt.s32.totalorder %s21, 1
        %s1389 = scalar_select %p1388, %s21, 1
        %s1390 = smul.addr %s1389, 2
        %s1391 = smul.addr %s1390, 8
        %s1392 = scalar_lea.vmem %s9, %s1391
      $region68: #{tpu_custom_call.1} parent=63 // pred_fallthru
        _
    $region64: #{tpu_custom_call.1} parent=5 // pred_fallthru
      _
  $region6: #{tpu_custom_call.1} parent=0 // loop_footer
    %s19 = sadd.s32 1, %s15
  $region7: #{tpu_custom_call.1} parent=0 // loop_footer_branch
    %14 = sbr.rel target = $region3
  $region8: #{tpu_custom_call.1} parent=0 // loop_exit
    _

</llo_original>
